<compile_context>
chip_gen: v5e
topology: v5e:2x2
jax: 0.10.0
libtpu: 0.0.40
codegen_flags: <defaults>
</compile_context>

<pallas_src>
import functools

import jax
import jax.numpy as jnp
from jax import lax
from jax.experimental import pallas as pl
from jax.experimental.pallas import tpu as pltpu

_MIB = 1024 * 1024


def _round_up(x, m):
    return ((x + m - 1) // m) * m


def _pad2(x, rows, cols):
    return jnp.pad(x, ((0, rows - x.shape[0]), (0, cols - x.shape[1])))


def _pad_last(x, new_last):
    pads = [(0, 0)] * (x.ndim - 1) + [(0, new_last - x.shape[-1])]
    return jnp.pad(x, pads)


def _pad_gate_cols(x, h, hp):
    """(..., 3h) -> (..., 3hp): gate block g (r/z/n) lands at columns [g*hp, g*hp+h)."""
    parts = [_pad_last(x[..., g * h:(g + 1) * h], hp) for g in range(3)]
    return jnp.concatenate(parts, axis=-1)


def graph_prop_kernel(h0_ref, adj_ref, indeg_ref, eagg_ref,
                      wh_ref, u1_ref, u2_ref, c_ref, bih_ref, bhh_ref,
                      h_out_ref, *, num_rounds, hp):
    """All propagation rounds in one invocation; h carried as a value (no grid steps)."""
    adj = adj_ref[...]          # (Np, Np)  A[v,u] = #edges u->v (edge multiplicity)
    indeg = indeg_ref[...]      # (Np, 1)   in-degree per node
    eagg = eagg_ref[...]        # (Np, Hp)  sum of incoming edge features per node

    def one_round(t, h):
        wh = wh_ref[t]          # (Hp, 6Hp)  [Wm0@WihT | WhhT], gate-padded columns
        u1 = u1_ref[t]          # (Hp, 3Hp)  Wm1@WihT
        u2 = u2_ref[t]          # (Hp, 3Hp)  Wm2@WihT
        c = c_ref[t]            # (1, 3Hp)   bm@WihT
        bih = bih_ref[t]        # (1, 3Hp)
        bhh = bhh_ref[t]        # (1, 3Hp)

        # gi = indeg*(h@U0 + c) + (A@h)@U1 + Eagg@U2 + bih ;  gh = h@WhhT + bhh
        nbr = jnp.dot(adj, h, preferred_element_type=jnp.float32)
        hw = jnp.dot(h, wh, preferred_element_type=jnp.float32)      # (Np, 6Hp)
        gi = (indeg * (hw[:, :3 * hp] + c)
              + jnp.dot(nbr, u1, preferred_element_type=jnp.float32)
              + jnp.dot(eagg, u2, preferred_element_type=jnp.float32)
              + bih)
        gh = hw[:, 3 * hp:] + bhh

        # PyTorch GRUCell; gate slices are 128-lane aligned since hp % 128 == 0.
        r = jax.nn.sigmoid(gi[:, :hp] + gh[:, :hp])
        z = jax.nn.sigmoid(gi[:, hp:2 * hp] + gh[:, hp:2 * hp])
        n = jnp.tanh(gi[:, 2 * hp:] + r * gh[:, 2 * hp:])
        return (1.0 - z) * n + z * h

    h_out_ref[...] = lax.fori_loop(0, num_rounds, one_round, h0_ref[...], unroll=True)


def graph_prop(h0, src, dst, e_feat, params):
    """Runs all propagation rounds in a single no-grid pallas_call (whole arrays in VMEM)."""
    N, H = h0.shape
    E = src.shape[0]
    T = params["wm"].shape[0]

    if E == 0:  # matches `if bg.number_of_edges() == 0: return`
        return h0

    f32 = jnp.float32
    Hp = _round_up(H, 128)   # lane-dense feature dim (3Hp / 6Hp also lane-aligned)
    Np = _round_up(N, 8)     # sublane-aligned node dim

    # --- exact algebraic collapse of edge gather / scatter-add (wrapper-side, once) ---
    adj = jnp.zeros((N, N), f32).at[dst, src].add(1.0)                 # (N, N)
    indeg = jnp.zeros((N,), f32).at[dst].add(1.0)[:, None]             # (N, 1)
    eagg = jnp.zeros((N, H), f32).at[dst].add(e_feat.astype(f32))      # (N, H)

    h0_p = _pad2(h0.astype(f32), Np, Hp)
    adj_p = _pad2(adj, Np, Np)
    indeg_p = _pad2(indeg, Np, 1)
    eagg_p = _pad2(eagg, Np, Hp)

    # --- fold message Linear into GRU input projection (exact, weight-only) ------------
    wm = params["wm"].astype(f32)        # (T, 3H, 2H)
    wihT = params["wihT"].astype(f32)    # (T, 2H, 3H)
    whhT = params["whhT"].astype(f32)    # (T, H, 3H)
    bm = params["bm"].astype(f32)        # (T, 2H)
    bih = params["bih"].astype(f32)      # (T, 3H)
    bhh = params["bhh"].astype(f32)      # (T, 3H)

    u0 = jnp.einsum("thk,tkj->thj", wm[:, :H, :], wihT)               # (T, H, 3H)
    u1 = jnp.einsum("thk,tkj->thj", wm[:, H:2 * H, :], wihT)          # (T, H, 3H)
    u2 = jnp.einsum("thk,tkj->thj", wm[:, 2 * H:, :], wihT)           # (T, H, 3H)
    c = jnp.einsum("tk,tkj->tj", bm, wihT)                            # (T, 3H)

    def pad_w(w):  # (T, H, 3H) -> (T, Hp, 3Hp): gate-padded cols, zero-padded rows
        w = _pad_gate_cols(w, H, Hp)
        return jnp.pad(w, ((0, 0), (0, Hp - H), (0, 0)))

    u0_p, u1_p, u2_p, whh_p = (pad_w(w) for w in (u0, u1, u2, whhT))
    wh_p = jnp.concatenate([u0_p, whh_p], axis=-1)                     # (T, Hp, 6Hp)
    c_p = _pad_gate_cols(c, H, Hp)[:, None, :]                         # (T, 1, 3Hp)
    bih_p = _pad_gate_cols(bih, H, Hp)[:, None, :]                     # (T, 1, 3Hp)
    bhh_p = _pad_gate_cols(bhh, H, Hp)[:, None, :]                     # (T, 1, 3Hp)

    operands = (h0_p, adj_p, indeg_p, eagg_p, wh_p, u1_p, u2_p, c_p, bih_p, bhh_p)
    working_set = sum(int(a.size) * a.dtype.itemsize for a in operands) + Np * Hp * 4
    vmem_limit = int(min(64 * _MIB, max(16 * _MIB, 2 * working_set + 4 * _MIB)))

    vmem_spec = pl.BlockSpec(memory_space=pltpu.MemorySpace.VMEM)
    out = pl.pallas_call(
        functools.partial(graph_prop_kernel, num_rounds=T, hp=Hp),
        in_specs=[vmem_spec] * len(operands),
        out_specs=vmem_spec,
        out_shape=jax.ShapeDtypeStruct((Np, Hp), f32),
        compiler_params=pltpu.CompilerParams(vmem_limit_bytes=vmem_limit),
    )(*operands)
    return out[:N, :H]


def graph_prop_reference(h0, src, dst, e_feat, params):
    """Pure-JAX reference (independent gather/scatter path) for verification."""
    N, H = h0.shape
    T = params["wm"].shape[0]
    h = h0
    for t in range(T):
        wm, bm = params["wm"][t], params["bm"][t]
        wihT, whhT = params["wihT"][t], params["whhT"][t]
        bih, bhh = params["bih"][t], params["bhh"][t]
        msg_in = jnp.concatenate([h[dst], h[src], e_feat], axis=1)     # (E, 3H)
        ae = msg_in @ wm + bm                                          # (E, 2H)
        a = jnp.zeros((N, 2 * H), jnp.float32).at[dst].add(ae)         # (N, 2H)
        gi = a @ wihT + bih
        gh = h @ whhT + bhh
        r = jax.nn.sigmoid(gi[:, :H] + gh[:, :H])
        z = jax.nn.sigmoid(gi[:, H:2 * H] + gh[:, H:2 * H])
        n = jnp.tanh(gi[:, 2 * H:] + r * gh[:, 2 * H:])
        h = (1.0 - z) * n + z * h
    return h


def make_params(key, num_rounds, H):
    """Deterministic synthetic parameters matching nn.Linear/nn.GRUCell shapes."""
    ks = jax.random.split(key, 6)
    scale = 0.1
    wm = scale * jax.random.normal(ks[0], (num_rounds, 3 * H, 2 * H), jnp.float32)
    bm = scale * jax.random.normal(ks[1], (num_rounds, 2 * H), jnp.float32)
    # torch GRUCell: weight_ih (3H, 2H), weight_hh (3H, H); stored transposed for x@W^T.
    wihT = scale * jax.random.normal(ks[2], (num_rounds, 2 * H, 3 * H), jnp.float32)
    whhT = scale * jax.random.normal(ks[3], (num_rounds, H, 3 * H), jnp.float32)
    bih = scale * jax.random.normal(ks[4], (num_rounds, 3 * H), jnp.float32)
    bhh = scale * jax.random.normal(ks[5], (num_rounds, 3 * H), jnp.float32)
    return dict(wm=wm, bm=bm, wihT=wihT, whhT=whhT, bih=bih, bhh=bhh)


if __name__ == "__main__":
    NUM_PROP_ROUNDS = 2
    NODE_HIDDEN = 32          # H
    NUM_NODES = 8             # N
    # deterministic edge list (E = 16), includes nodes with varying in-degree
    src = jnp.array([0, 1, 2, 3, 4, 5, 6, 7, 0, 2, 4, 6, 1, 3, 5, 7], jnp.int32)
    dst = jnp.array([1, 2, 3, 4, 5, 6, 7, 0, 4, 6, 0, 2, 5, 7, 1, 3], jnp.int32)
    NUM_EDGES = src.shape[0]

    key = jax.random.PRNGKey(0)
    k_h, k_e, k_p = jax.random.split(key, 3)
    h0 = jax.random.normal(k_h, (NUM_NODES, NODE_HIDDEN), jnp.float32)
    e_feat = jax.random.normal(k_e, (NUM_EDGES, NODE_HIDDEN), jnp.float32)
    params = make_params(k_p, NUM_PROP_ROUNDS, NODE_HIDDEN)

    out = graph_prop(h0, src, dst, e_feat, params)
    out = jax.block_until_ready(out)

    ref = graph_prop_reference(h0, src, dst, e_feat, params)
    assert out.shape == (NUM_NODES, NODE_HIDDEN)
    assert jnp.allclose(out, ref, atol=1e-4, rtol=1e-4), "mismatch vs JAX reference"

    print("KERNEL_OK")
</pallas_src>

<mosaic_0001>
module attributes {stable_mosaic.version = 11 : i64} {
  func.func @graph_prop_kernel(%arg0: memref<8x128xf32, #tpu.memory_space<vmem>>, %arg1: memref<8x8xf32, #tpu.memory_space<vmem>>, %arg2: memref<8x1xf32, #tpu.memory_space<vmem>>, %arg3: memref<8x128xf32, #tpu.memory_space<vmem>>, %arg4: memref<2x128x768xf32, #tpu.memory_space<vmem>>, %arg5: memref<2x128x384xf32, #tpu.memory_space<vmem>>, %arg6: memref<2x128x384xf32, #tpu.memory_space<vmem>>, %arg7: memref<2x1x384xf32, #tpu.memory_space<vmem>>, %arg8: memref<2x1x384xf32, #tpu.memory_space<vmem>>, %arg9: memref<2x1x384xf32, #tpu.memory_space<vmem>>, %arg10: memref<8x128xf32, #tpu.memory_space<vmem>>) attributes {dimension_semantics = [], scalar_prefetch = 0 : i64, scratch_operands = 0 : i64, tpu.core_type = #tpu.core_type<tc>} {
    %c0 = arith.constant 0 : index
    %c0_0 = arith.constant 0 : index
    %0 = vector.load %arg1[%c0, %c0_0] : memref<8x8xf32, #tpu.memory_space<vmem>>, vector<8x8xf32>
    %c0_1 = arith.constant 0 : index
    %c0_2 = arith.constant 0 : index
    %1 = vector.load %arg2[%c0_1, %c0_2] : memref<8x1xf32, #tpu.memory_space<vmem>>, vector<8x1xf32>
    %c0_3 = arith.constant 0 : index
    %c0_4 = arith.constant 0 : index
    %2 = vector.load %arg3[%c0_3, %c0_4] : memref<8x128xf32, #tpu.memory_space<vmem>>, vector<8x128xf32>
    %c0_5 = arith.constant 0 : index
    %c0_6 = arith.constant 0 : index
    %3 = vector.load %arg0[%c0_5, %c0_6] : memref<8x128xf32, #tpu.memory_space<vmem>>, vector<8x128xf32>
    %c0_i32 = arith.constant 0 : i32
    %4 = arith.index_cast %c0_i32 : i32 to index
    %c0_7 = arith.constant 0 : index
    %c0_8 = arith.constant 0 : index
    %5 = vector.load %arg4[%4, %c0_7, %c0_8] : memref<2x128x768xf32, #tpu.memory_space<vmem>>, vector<1x128x768xf32>
    %6 = vector.shape_cast %5 : vector<1x128x768xf32> to vector<128x768xf32>
    %7 = arith.index_cast %c0_i32 : i32 to index
    %c0_9 = arith.constant 0 : index
    %c0_10 = arith.constant 0 : index
    %8 = vector.load %arg5[%7, %c0_9, %c0_10] : memref<2x128x384xf32, #tpu.memory_space<vmem>>, vector<1x128x384xf32>
    %9 = vector.shape_cast %8 : vector<1x128x384xf32> to vector<128x384xf32>
    %10 = arith.index_cast %c0_i32 : i32 to index
    %c0_11 = arith.constant 0 : index
    %c0_12 = arith.constant 0 : index
    %11 = vector.load %arg6[%10, %c0_11, %c0_12] : memref<2x128x384xf32, #tpu.memory_space<vmem>>, vector<1x128x384xf32>
    %12 = vector.shape_cast %11 : vector<1x128x384xf32> to vector<128x384xf32>
    %13 = arith.index_cast %c0_i32 : i32 to index
    %c0_13 = arith.constant 0 : index
    %c0_14 = arith.constant 0 : index
    %14 = vector.load %arg7[%13, %c0_13, %c0_14] : memref<2x1x384xf32, #tpu.memory_space<vmem>>, vector<1x1x384xf32>
    %15 = vector.shape_cast %14 : vector<1x1x384xf32> to vector<1x384xf32>
    %16 = arith.index_cast %c0_i32 : i32 to index
    %c0_15 = arith.constant 0 : index
    %c0_16 = arith.constant 0 : index
    %17 = vector.load %arg8[%16, %c0_15, %c0_16] : memref<2x1x384xf32, #tpu.memory_space<vmem>>, vector<1x1x384xf32>
    %18 = vector.shape_cast %17 : vector<1x1x384xf32> to vector<1x384xf32>
    %19 = arith.index_cast %c0_i32 : i32 to index
    %c0_17 = arith.constant 0 : index
    %c0_18 = arith.constant 0 : index
    %20 = vector.load %arg9[%19, %c0_17, %c0_18] : memref<2x1x384xf32, #tpu.memory_space<vmem>>, vector<1x1x384xf32>
    %21 = vector.shape_cast %20 : vector<1x1x384xf32> to vector<1x384xf32>
    %cst = arith.constant dense<0.000000e+00> : vector<8x128xf32>
    %22 = tpu.matmul %0, %3, %cst {dimension_numbers = #tpu.dot_dimension_numbers<[1], [0], [0], [1], [0, 0, 1, 1], [], []>} : vector<8x8xf32>, vector<8x128xf32>, vector<8x128xf32> -> vector<8x128xf32>
    %cst_19 = arith.constant dense<0.000000e+00> : vector<8x768xf32>
    %23 = tpu.matmul %3, %6, %cst_19 {dimension_numbers = #tpu.dot_dimension_numbers<[1], [0], [0], [1], [0, 0, 1, 1], [], []>} : vector<8x128xf32>, vector<128x768xf32>, vector<8x768xf32> -> vector<8x768xf32>
    %24 = vector.extract_strided_slice %23 {offsets = [0, 0], sizes = [8, 384], strides = [1, 1]} : vector<8x768xf32> to vector<8x384xf32>
    %25 = vector.broadcast %15 : vector<1x384xf32> to vector<8x384xf32>
    %26 = arith.addf %24, %25 : vector<8x384xf32>
    %27 = vector.broadcast %1 : vector<8x1xf32> to vector<8x384xf32>
    %28 = arith.mulf %27, %26 : vector<8x384xf32>
    %cst_20 = arith.constant dense<0.000000e+00> : vector<8x384xf32>
    %29 = tpu.matmul %22, %9, %cst_20 {dimension_numbers = #tpu.dot_dimension_numbers<[1], [0], [0], [1], [0, 0, 1, 1], [], []>} : vector<8x128xf32>, vector<128x384xf32>, vector<8x384xf32> -> vector<8x384xf32>
    %30 = arith.addf %28, %29 : vector<8x384xf32>
    %cst_21 = arith.constant dense<0.000000e+00> : vector<8x384xf32>
    %31 = tpu.matmul %2, %12, %cst_21 {dimension_numbers = #tpu.dot_dimension_numbers<[1], [0], [0], [1], [0, 0, 1, 1], [], []>} : vector<8x128xf32>, vector<128x384xf32>, vector<8x384xf32> -> vector<8x384xf32>
    %32 = arith.addf %30, %31 : vector<8x384xf32>
    %33 = vector.broadcast %18 : vector<1x384xf32> to vector<8x384xf32>
    %34 = arith.addf %32, %33 : vector<8x384xf32>
    %35 = vector.extract_strided_slice %23 {offsets = [0, 384], sizes = [8, 384], strides = [1, 1]} : vector<8x768xf32> to vector<8x384xf32>
    %36 = vector.broadcast %21 : vector<1x384xf32> to vector<8x384xf32>
    %37 = arith.addf %35, %36 : vector<8x384xf32>
    %38 = vector.extract_strided_slice %34 {offsets = [0, 0], sizes = [8, 128], strides = [1, 1]} : vector<8x384xf32> to vector<8x128xf32>
    %39 = vector.extract_strided_slice %37 {offsets = [0, 0], sizes = [8, 128], strides = [1, 1]} : vector<8x384xf32> to vector<8x128xf32>
    %40 = arith.addf %38, %39 : vector<8x128xf32>
    %41 = arith.negf %40 : vector<8x128xf32>
    %42 = math.exp %41 : vector<8x128xf32>
    %cst_22 = arith.constant 1.000000e+00 : f32
    %43 = vector.broadcast %cst_22 : f32 to vector<8x128xf32>
    %44 = arith.addf %43, %42 : vector<8x128xf32>
    %45 = arith.divf %43, %44 : vector<8x128xf32>
    %46 = vector.extract_strided_slice %34 {offsets = [0, 128], sizes = [8, 128], strides = [1, 1]} : vector<8x384xf32> to vector<8x128xf32>
    %47 = vector.extract_strided_slice %37 {offsets = [0, 128], sizes = [8, 128], strides = [1, 1]} : vector<8x384xf32> to vector<8x128xf32>
    %48 = arith.addf %46, %47 : vector<8x128xf32>
    %49 = arith.negf %48 : vector<8x128xf32>
    %50 = math.exp %49 : vector<8x128xf32>
    %cst_23 = arith.constant 1.000000e+00 : f32
    %51 = vector.broadcast %cst_23 : f32 to vector<8x128xf32>
    %52 = arith.addf %51, %50 : vector<8x128xf32>
    %53 = arith.divf %51, %52 : vector<8x128xf32>
    %54 = vector.extract_strided_slice %34 {offsets = [0, 256], sizes = [8, 128], strides = [1, 1]} : vector<8x384xf32> to vector<8x128xf32>
    %55 = vector.extract_strided_slice %37 {offsets = [0, 256], sizes = [8, 128], strides = [1, 1]} : vector<8x384xf32> to vector<8x128xf32>
    %56 = arith.mulf %45, %55 : vector<8x128xf32>
    %57 = arith.addf %54, %56 : vector<8x128xf32>
    %58 = math.tanh %57 : vector<8x128xf32>
    %cst_24 = arith.constant 1.000000e+00 : f32
    %59 = vector.broadcast %cst_24 : f32 to vector<8x128xf32>
    %60 = arith.subf %59, %53 : vector<8x128xf32>
    %61 = arith.mulf %60, %58 : vector<8x128xf32>
    %62 = arith.mulf %53, %3 : vector<8x128xf32>
    %63 = arith.addf %61, %62 : vector<8x128xf32>
    %c1_i32 = arith.constant 1 : i32
    %64 = arith.index_cast %c1_i32 : i32 to index
    %c0_25 = arith.constant 0 : index
    %c0_26 = arith.constant 0 : index
    %65 = vector.load %arg4[%64, %c0_25, %c0_26] : memref<2x128x768xf32, #tpu.memory_space<vmem>>, vector<1x128x768xf32>
    %66 = vector.shape_cast %65 : vector<1x128x768xf32> to vector<128x768xf32>
    %67 = arith.index_cast %c1_i32 : i32 to index
    %c0_27 = arith.constant 0 : index
    %c0_28 = arith.constant 0 : index
    %68 = vector.load %arg5[%67, %c0_27, %c0_28] : memref<2x128x384xf32, #tpu.memory_space<vmem>>, vector<1x128x384xf32>
    %69 = vector.shape_cast %68 : vector<1x128x384xf32> to vector<128x384xf32>
    %70 = arith.index_cast %c1_i32 : i32 to index
    %c0_29 = arith.constant 0 : index
    %c0_30 = arith.constant 0 : index
    %71 = vector.load %arg6[%70, %c0_29, %c0_30] : memref<2x128x384xf32, #tpu.memory_space<vmem>>, vector<1x128x384xf32>
    %72 = vector.shape_cast %71 : vector<1x128x384xf32> to vector<128x384xf32>
    %73 = arith.index_cast %c1_i32 : i32 to index
    %c0_31 = arith.constant 0 : index
    %c0_32 = arith.constant 0 : index
    %74 = vector.load %arg7[%73, %c0_31, %c0_32] : memref<2x1x384xf32, #tpu.memory_space<vmem>>, vector<1x1x384xf32>
    %75 = vector.shape_cast %74 : vector<1x1x384xf32> to vector<1x384xf32>
    %76 = arith.index_cast %c1_i32 : i32 to index
    %c0_33 = arith.constant 0 : index
    %c0_34 = arith.constant 0 : index
    %77 = vector.load %arg8[%76, %c0_33, %c0_34] : memref<2x1x384xf32, #tpu.memory_space<vmem>>, vector<1x1x384xf32>
    %78 = vector.shape_cast %77 : vector<1x1x384xf32> to vector<1x384xf32>
    %79 = arith.index_cast %c1_i32 : i32 to index
    %c0_35 = arith.constant 0 : index
    %c0_36 = arith.constant 0 : index
    %80 = vector.load %arg9[%79, %c0_35, %c0_36] : memref<2x1x384xf32, #tpu.memory_space<vmem>>, vector<1x1x384xf32>
    %81 = vector.shape_cast %80 : vector<1x1x384xf32> to vector<1x384xf32>
    %cst_37 = arith.constant dense<0.000000e+00> : vector<8x128xf32>
    %82 = tpu.matmul %0, %63, %cst_37 {dimension_numbers = #tpu.dot_dimension_numbers<[1], [0], [0], [1], [0, 0, 1, 1], [], []>} : vector<8x8xf32>, vector<8x128xf32>, vector<8x128xf32> -> vector<8x128xf32>
    %cst_38 = arith.constant dense<0.000000e+00> : vector<8x768xf32>
    %83 = tpu.matmul %63, %66, %cst_38 {dimension_numbers = #tpu.dot_dimension_numbers<[1], [0], [0], [1], [0, 0, 1, 1], [], []>} : vector<8x128xf32>, vector<128x768xf32>, vector<8x768xf32> -> vector<8x768xf32>
    %84 = vector.extract_strided_slice %83 {offsets = [0, 0], sizes = [8, 384], strides = [1, 1]} : vector<8x768xf32> to vector<8x384xf32>
    %85 = vector.broadcast %75 : vector<1x384xf32> to vector<8x384xf32>
    %86 = arith.addf %84, %85 : vector<8x384xf32>
    %87 = vector.broadcast %1 : vector<8x1xf32> to vector<8x384xf32>
    %88 = arith.mulf %87, %86 : vector<8x384xf32>
    %cst_39 = arith.constant dense<0.000000e+00> : vector<8x384xf32>
    %89 = tpu.matmul %82, %69, %cst_39 {dimension_numbers = #tpu.dot_dimension_numbers<[1], [0], [0], [1], [0, 0, 1, 1], [], []>} : vector<8x128xf32>, vector<128x384xf32>, vector<8x384xf32> -> vector<8x384xf32>
    %90 = arith.addf %88, %89 : vector<8x384xf32>
    %cst_40 = arith.constant dense<0.000000e+00> : vector<8x384xf32>
    %91 = tpu.matmul %2, %72, %cst_40 {dimension_numbers = #tpu.dot_dimension_numbers<[1], [0], [0], [1], [0, 0, 1, 1], [], []>} : vector<8x128xf32>, vector<128x384xf32>, vector<8x384xf32> -> vector<8x384xf32>
    %92 = arith.addf %90, %91 : vector<8x384xf32>
    %93 = vector.broadcast %78 : vector<1x384xf32> to vector<8x384xf32>
    %94 = arith.addf %92, %93 : vector<8x384xf32>
    %95 = vector.extract_strided_slice %83 {offsets = [0, 384], sizes = [8, 384], strides = [1, 1]} : vector<8x768xf32> to vector<8x384xf32>
    %96 = vector.broadcast %81 : vector<1x384xf32> to vector<8x384xf32>
    %97 = arith.addf %95, %96 : vector<8x384xf32>
    %98 = vector.extract_strided_slice %94 {offsets = [0, 0], sizes = [8, 128], strides = [1, 1]} : vector<8x384xf32> to vector<8x128xf32>
    %99 = vector.extract_strided_slice %97 {offsets = [0, 0], sizes = [8, 128], strides = [1, 1]} : vector<8x384xf32> to vector<8x128xf32>
    %100 = arith.addf %98, %99 : vector<8x128xf32>
    %101 = arith.negf %100 : vector<8x128xf32>
    %102 = math.exp %101 : vector<8x128xf32>
    %cst_41 = arith.constant 1.000000e+00 : f32
    %103 = vector.broadcast %cst_41 : f32 to vector<8x128xf32>
    %104 = arith.addf %103, %102 : vector<8x128xf32>
    %105 = arith.divf %103, %104 : vector<8x128xf32>
    %106 = vector.extract_strided_slice %94 {offsets = [0, 128], sizes = [8, 128], strides = [1, 1]} : vector<8x384xf32> to vector<8x128xf32>
    %107 = vector.extract_strided_slice %97 {offsets = [0, 128], sizes = [8, 128], strides = [1, 1]} : vector<8x384xf32> to vector<8x128xf32>
    %108 = arith.addf %106, %107 : vector<8x128xf32>
    %109 = arith.negf %108 : vector<8x128xf32>
    %110 = math.exp %109 : vector<8x128xf32>
    %cst_42 = arith.constant 1.000000e+00 : f32
    %111 = vector.broadcast %cst_42 : f32 to vector<8x128xf32>
    %112 = arith.addf %111, %110 : vector<8x128xf32>
    %113 = arith.divf %111, %112 : vector<8x128xf32>
    %114 = vector.extract_strided_slice %94 {offsets = [0, 256], sizes = [8, 128], strides = [1, 1]} : vector<8x384xf32> to vector<8x128xf32>
    %115 = vector.extract_strided_slice %97 {offsets = [0, 256], sizes = [8, 128], strides = [1, 1]} : vector<8x384xf32> to vector<8x128xf32>
    %116 = arith.mulf %105, %115 : vector<8x128xf32>
    %117 = arith.addf %114, %116 : vector<8x128xf32>
    %118 = math.tanh %117 : vector<8x128xf32>
    %cst_43 = arith.constant 1.000000e+00 : f32
    %119 = vector.broadcast %cst_43 : f32 to vector<8x128xf32>
    %120 = arith.subf %119, %113 : vector<8x128xf32>
    %121 = arith.mulf %120, %118 : vector<8x128xf32>
    %122 = arith.mulf %113, %63 : vector<8x128xf32>
    %123 = arith.addf %121, %122 : vector<8x128xf32>
    %c2_i32 = arith.constant 2 : i32
    %c0_44 = arith.constant 0 : index
    %c0_45 = arith.constant 0 : index
    %124 = vector.load %arg10[%c0_44, %c0_45] : memref<8x128xf32, #tpu.memory_space<vmem>>, vector<8x128xf32>
    tpu.vector_store %arg10[%c0_44, %c0_45], %123 {strides = array<i32>} : memref<8x128xf32, #tpu.memory_space<vmem>>, vector<8x128xf32>,
    return
  }
}

</mosaic_0001>

<llo_original>
// kernel: tpu_custom_call.1
$region0: #{tpu_custom_call.1}
  #allocation0 [shape = 'u32[]', space=smem, size = 0x4, offset = 0x4, fixed_abs, tag = 'smem constant byte address 0x4 - core index']
  #allocation1 [shape = 'u32[72,128]{1,0:T(1,128)}', space=vmem, size = 0x9000, scoped, tag = 'internal scratch']
  %s0 = inlined_call_operand.vmem [shape: f32[8,128], index: 0, kind: input, shape index: {}]
  %s1 = inlined_call_operand.hbm [shape: f32[8,8], index: 1, kind: input, shape index: {}]
  %s2 = inlined_call_operand.vmem [shape: f32[8,1], index: 2, kind: input, shape index: {}]
  %s3 = inlined_call_operand.hbm [shape: f32[8,128], index: 3, kind: input, shape index: {}]
  %s4 = inlined_call_operand.hbm [shape: f32[2,128,768], index: 4, kind: input, shape index: {}]
  %s5 = inlined_call_operand.hbm [shape: f32[2,128,384], index: 5, kind: input, shape index: {}]
  %s6 = inlined_call_operand.hbm [shape: f32[2,128,384], index: 6, kind: input, shape index: {}]
  %s7 = inlined_call_operand.hbm [shape: f32[2,1,384], index: 7, kind: input, shape index: {}]
  %s8 = inlined_call_operand.vmem [shape: f32[2,1,384], index: 8, kind: input, shape index: {}]
  %s9 = inlined_call_operand.hbm [shape: f32[2,1,384], index: 9, kind: input, shape index: {}]
  %s10 = inlined_call_operand.hbm [shape: f32[8,128], index: 10, kind: output, shape index: {}]
  %s11 = sld [smem:[#allocation0]]
  $region78: #{tpu_custom_call.1} parent=0
    _
  %s13 = ssub.s32 1, %s11
  %s14 = scalar_select 0, %s13, %s11
  $region1: #{tpu_custom_call.1} parent=0
    #allocation2 [shape = 'u8[4096]{0}', space=vmem, size = 0x1000, scoped, tag = 'input window, operand 1, single buffered']
    #allocation3 [shape = 's32[1]{0}', space=sflag, size = 0x4, scoped, tag = 'scoped memory for tpu_custom_call.1']
    #allocation4 [shape = 's32[1]{0}', space=sflag, size = 0x4, scoped, tag = 'scoped memory for tpu_custom_call.1']
    #allocation5 [shape = 'u8[4096]{0}', space=vmem, size = 0x1000, scoped, tag = 'input window, operand 3, single buffered']
    #allocation6 [shape = 's32[1]{0}', space=sflag, size = 0x4, scoped, tag = 'scoped memory for tpu_custom_call.1']
    #allocation7 [shape = 'u8[786432]{0}', space=vmem, size = 0xc0000, scoped, tag = 'input window, operand 4, single buffered']
    #allocation8 [shape = 'u8[393216]{0}', space=vmem, size = 0x60000, scoped, tag = 'input window, operand 5, single buffered']
    #allocation9 [shape = 's32[1]{0}', space=sflag, size = 0x4, scoped, tag = 'scoped memory for tpu_custom_call.1']
    #allocation10 [shape = 'u8[393216]{0}', space=vmem, size = 0x60000, scoped, tag = 'input window, operand 6, single buffered']
    #allocation11 [shape = 'u8[3072]{0}', space=vmem, size = 0xc00, scoped, tag = 'input window, operand 7, single buffered']
    #allocation12 [shape = 's32[1]{0}', space=sflag, size = 0x4, scoped, tag = 'scoped memory for tpu_custom_call.1']
    #allocation13 [shape = 'u8[3072]{0}', space=vmem, size = 0xc00, scoped, tag = 'input window, operand 9, single buffered']
    #allocation14 [shape = 'u8[4096]{0}', space=vmem, size = 0x1000, scoped, tag = 'output window, operand 0, single buffered']
    %15 = vsyncpa [#allocation3], 0
    %16 = vsyncpa [#allocation6], 0
    %17 = vsyncpa [#allocation9], 0
    %18 = vsyncpa [#allocation12], 0
    %19 = vsyncpa [#allocation4], 0
    // Predicated region
    $region2: #{tpu_custom_call.1} parent=1 // pred_check
      _
    $region3: #{tpu_custom_call.1} parent=1 // pred_check_branch
      %21 = sbr.rel (0) target = $region5
    $region4: #{tpu_custom_call.1} parent=1 // pred_region
      _
    $region5: #{tpu_custom_call.1} parent=1 // pred_fallthru
      _
    // Predicated region
    $region6: #{tpu_custom_call.1} parent=1 // pred_check
      _
    $region7: #{tpu_custom_call.1} parent=1 // pred_check_branch
      %23 = sbr.rel (0) target = $region9
    $region8: #{tpu_custom_call.1} parent=1 // pred_region
      %25 = vsyncadd [#allocation3], 0
      %s27 = sshll.u32 %s1, 4
      %s28 = int_to_ptr.hbm [resolvable:$true] %s27
      %s29 = sshll.u32 [#allocation2], 4
      %s30 = int_to_ptr.vmem [resolvable:$true] %s29
      %32 = dma.hbm_to_vmem [thread:$0]  %s28, 128, %s30, [#allocation3]
    $region9: #{tpu_custom_call.1} parent=1 // pred_fallthru
      _
    // Predicated region
    $region10: #{tpu_custom_call.1} parent=1 // pred_check
      _
    $region11: #{tpu_custom_call.1} parent=1 // pred_check_branch
      %34 = sbr.rel (0) target = $region13
    $region12: #{tpu_custom_call.1} parent=1 // pred_region
      _
    $region13: #{tpu_custom_call.1} parent=1 // pred_fallthru
      _
    // Predicated region
    $region14: #{tpu_custom_call.1} parent=1 // pred_check
      _
    $region15: #{tpu_custom_call.1} parent=1 // pred_check_branch
      %36 = sbr.rel (0) target = $region17
    $region16: #{tpu_custom_call.1} parent=1 // pred_region
      %38 = vsyncadd [#allocation6], 0
      %s40 = sshll.u32 %s3, 4
      %s41 = int_to_ptr.hbm [resolvable:$true] %s40
      %s42 = sshll.u32 [#allocation5], 4
      %s43 = int_to_ptr.vmem [resolvable:$true] %s42
      %45 = dma.hbm_to_vmem [thread:$0]  %s41, 128, %s43, [#allocation6]
    $region17: #{tpu_custom_call.1} parent=1 // pred_fallthru
      _
    // Predicated region
    $region18: #{tpu_custom_call.1} parent=1 // pred_check
      _
    $region19: #{tpu_custom_call.1} parent=1 // pred_check_branch
      %47 = sbr.rel (0) target = $region21
    $region20: #{tpu_custom_call.1} parent=1 // pred_region
      %49 = vsyncadd [#allocation6], 0
      %s50 = sshll.u32 %s4, 4
      %s51 = int_to_ptr.hbm [resolvable:$true] %s50
      %s52 = sshll.u32 [#allocation7], 4
      %s53 = int_to_ptr.vmem [resolvable:$true] %s52
      %58 = dma.hbm_to_vmem [thread:$0]  %s51, 24576, %s53, [#allocation6], 768, 768, 48
    $region21: #{tpu_custom_call.1} parent=1 // pred_fallthru
      _
    // Predicated region
    $region22: #{tpu_custom_call.1} parent=1 // pred_check
      _
    $region23: #{tpu_custom_call.1} parent=1 // pred_check_branch
      %60 = sbr.rel (0) target = $region25
    $region24: #{tpu_custom_call.1} parent=1 // pred_region
      %62 = vsyncadd [#allocation9], 0
      %s63 = sshll.u32 %s5, 4
      %s64 = int_to_ptr.hbm [resolvable:$true] %s63
      %s65 = sshll.u32 [#allocation8], 4
      %s66 = int_to_ptr.vmem [resolvable:$true] %s65
      %71 = dma.hbm_to_vmem [thread:$0]  %s64, 12288, %s66, [#allocation9], 384, 384, 24
    $region25: #{tpu_custom_call.1} parent=1 // pred_fallthru
      _
    // Predicated region
    $region26: #{tpu_custom_call.1} parent=1 // pred_check
      _
    $region27: #{tpu_custom_call.1} parent=1 // pred_check_branch
      %73 = sbr.rel (0) target = $region29
    $region28: #{tpu_custom_call.1} parent=1 // pred_region
      %75 = vsyncadd [#allocation9], 0
      %s76 = sshll.u32 %s6, 4
      %s77 = int_to_ptr.hbm [resolvable:$true] %s76
      %s78 = sshll.u32 [#allocation10], 4
      %s79 = int_to_ptr.vmem [resolvable:$true] %s78
      %84 = dma.hbm_to_vmem [thread:$0]  %s77, 12288, %s79, [#allocation9], 384, 384, 24
    $region29: #{tpu_custom_call.1} parent=1 // pred_fallthru
      _
    // Predicated region
    $region30: #{tpu_custom_call.1} parent=1 // pred_check
      _
    $region31: #{tpu_custom_call.1} parent=1 // pred_check_branch
      %86 = sbr.rel (0) target = $region33
    $region32: #{tpu_custom_call.1} parent=1 // pred_region
      %88 = vsyncadd [#allocation12], 0
      %s89 = sshll.u32 %s7, 4
      %s90 = int_to_ptr.hbm [resolvable:$true] %s89
      %s91 = sshll.u32 [#allocation11], 4
      %s92 = int_to_ptr.vmem [resolvable:$true] %s91
      %97 = dma.hbm_to_vmem [thread:$0]  %s90, 96, %s92, [#allocation12], 48, 48, 3
    $region33: #{tpu_custom_call.1} parent=1 // pred_fallthru
      _
    // Predicated region
    $region34: #{tpu_custom_call.1} parent=1 // pred_check
      _
    $region35: #{tpu_custom_call.1} parent=1 // pred_check_branch
      %99 = sbr.rel (0) target = $region37
    $region36: #{tpu_custom_call.1} parent=1 // pred_region
      _
    $region37: #{tpu_custom_call.1} parent=1 // pred_fallthru
      _
    // Predicated region
    $region38: #{tpu_custom_call.1} parent=1 // pred_check
      _
    $region39: #{tpu_custom_call.1} parent=1 // pred_check_branch
      %101 = sbr.rel (0) target = $region41
    $region40: #{tpu_custom_call.1} parent=1 // pred_region
      %103 = vsyncadd [#allocation12], 0
      %s104 = sshll.u32 %s9, 4
      %s105 = int_to_ptr.hbm [resolvable:$true] %s104
      %s106 = sshll.u32 [#allocation13], 4
      %s107 = int_to_ptr.vmem [resolvable:$true] %s106
      %112 = dma.hbm_to_vmem [thread:$0]  %s105, 96, %s107, [#allocation12], 48, 48, 3
    $region41: #{tpu_custom_call.1} parent=1 // pred_fallthru
      _
    // Predicated region
    $region42: #{tpu_custom_call.1} parent=1 // pred_check
      _
    $region43: #{tpu_custom_call.1} parent=1 // pred_check_branch
      %114 = sbr.rel (0) target = $region45
    $region44: #{tpu_custom_call.1} parent=1 // pred_region
      %116 = dma.done [#allocation3], 128
    $region45: #{tpu_custom_call.1} parent=1 // pred_fallthru
      _
    // Predicated region
    $region46: #{tpu_custom_call.1} parent=1 // pred_check
      _
    $region47: #{tpu_custom_call.1} parent=1 // pred_check_branch
      %118 = sbr.rel (0) target = $region49
    $region48: #{tpu_custom_call.1} parent=1 // pred_region
      %120 = dma.done [#allocation6], 128
    $region49: #{tpu_custom_call.1} parent=1 // pred_fallthru
      _
    // Predicated region
    $region50: #{tpu_custom_call.1} parent=1 // pred_check
      _
    $region51: #{tpu_custom_call.1} parent=1 // pred_check_branch
      %122 = sbr.rel (0) target = $region53
    $region52: #{tpu_custom_call.1} parent=1 // pred_region
      %124 = dma.done [#allocation6], 24576
    $region53: #{tpu_custom_call.1} parent=1 // pred_fallthru
      _
    // Predicated region
    $region54: #{tpu_custom_call.1} parent=1 // pred_check
      _
    $region55: #{tpu_custom_call.1} parent=1 // pred_check_branch
      %126 = sbr.rel (0) target = $region57
    $region56: #{tpu_custom_call.1} parent=1 // pred_region
      %128 = dma.done [#allocation9], 12288
    $region57: #{tpu_custom_call.1} parent=1 // pred_fallthru
      _
    // Predicated region
    $region58: #{tpu_custom_call.1} parent=1 // pred_check
      _
    $region59: #{tpu_custom_call.1} parent=1 // pred_check_branch
      %130 = sbr.rel (0) target = $region61
    $region60: #{tpu_custom_call.1} parent=1 // pred_region
      %132 = dma.done [#allocation9], 12288
    $region61: #{tpu_custom_call.1} parent=1 // pred_fallthru
      _
    // Predicated region
    $region62: #{tpu_custom_call.1} parent=1 // pred_check
      _
    $region63: #{tpu_custom_call.1} parent=1 // pred_check_branch
      %134 = sbr.rel (0) target = $region65
    $region64: #{tpu_custom_call.1} parent=1 // pred_region
      %136 = dma.done [#allocation12], 96
    $region65: #{tpu_custom_call.1} parent=1 // pred_fallthru
      _
    // Predicated region
    $region66: #{tpu_custom_call.1} parent=1 // pred_check
      _
    $region67: #{tpu_custom_call.1} parent=1 // pred_check_branch
      %138 = sbr.rel (0) target = $region69
    $region68: #{tpu_custom_call.1} parent=1 // pred_region
      %140 = dma.done [#allocation12], 96
    $region69: #{tpu_custom_call.1} parent=1 // pred_fallthru
      _
    %v141 = vld [vmem:[#allocation2] sm:$0xff]
    %v142 = vld [vmem:[%s2] sm:$0xff]
    %v143 = vld [vmem:[#allocation5] sm:$0xff]
    %v144 = vld [vmem:[%s0] sm:$0xff]
    %v145 = vld [vmem:[#allocation7] sm:$0xff]
    %v146 = vld [vmem:[#allocation7 + $0x8] sm:$0xff]
    %v147 = vld [vmem:[#allocation7 + $0x10] sm:$0xff]
    %v148 = vld [vmem:[#allocation7 + $0x18] sm:$0xff]
    %v149 = vld [vmem:[#allocation7 + $0x20] sm:$0xff]
    %v150 = vld [vmem:[#allocation7 + $0x28] sm:$0xff]
    %v151 = vld [vmem:[#allocation7 + $0x30] sm:$0xff]
    %v152 = vld [vmem:[#allocation7 + $0x38] sm:$0xff]
    %v153 = vld [vmem:[#allocation7 + $0x40] sm:$0xff]
    %v154 = vld [vmem:[#allocation7 + $0x48] sm:$0xff]
    %v155 = vld [vmem:[#allocation7 + $0x50] sm:$0xff]
    %v156 = vld [vmem:[#allocation7 + $0x58] sm:$0xff]
    %v157 = vld [vmem:[#allocation7 + $0x60] sm:$0xff]
    %v158 = vld [vmem:[#allocation7 + $0x68] sm:$0xff]
    %v159 = vld [vmem:[#allocation7 + $0x70] sm:$0xff]
    %v160 = vld [vmem:[#allocation7 + $0x78] sm:$0xff]
    %v161 = vld [vmem:[#allocation7 + $0x80] sm:$0xff]
    %v162 = vld [vmem:[#allocation7 + $0x88] sm:$0xff]
    %v163 = vld [vmem:[#allocation7 + $0x90] sm:$0xff]
    %v164 = vld [vmem:[#allocation7 + $0x98] sm:$0xff]
    %v165 = vld [vmem:[#allocation7 + $0xa0] sm:$0xff]
    %v166 = vld [vmem:[#allocation7 + $0xa8] sm:$0xff]
    %v167 = vld [vmem:[#allocation7 + $0xb0] sm:$0xff]
    %v168 = vld [vmem:[#allocation7 + $0xb8] sm:$0xff]
    %v169 = vld [vmem:[#allocation7 + $0xc0] sm:$0xff]
    %v170 = vld [vmem:[#allocation7 + $0xc8] sm:$0xff]
    %v171 = vld [vmem:[#allocation7 + $0xd0] sm:$0xff]
    %v172 = vld [vmem:[#allocation7 + $0xd8] sm:$0xff]
    %v173 = vld [vmem:[#allocation7 + $0xe0] sm:$0xff]
    %v174 = vld [vmem:[#allocation7 + $0xe8] sm:$0xff]
    %v175 = vld [vmem:[#allocation7 + $0xf0] sm:$0xff]
    %v176 = vld [vmem:[#allocation7 + $0xf8] sm:$0xff]
    %v177 = vld [vmem:[#allocation7 + $0x100] sm:$0xff]
    %v178 = vld [vmem:[#allocation7 + $0x108] sm:$0xff]
    %v179 = vld [vmem:[#allocation7 + $0x110] sm:$0xff]
    %v180 = vld [vmem:[#allocation7 + $0x118] sm:$0xff]
    %v181 = vld [vmem:[#allocation7 + $0x120] sm:$0xff]
    %v182 = vld [vmem:[#allocation7 + $0x128] sm:$0xff]
    %v183 = vld [vmem:[#allocation7 + $0x130] sm:$0xff]
    %v184 = vld [vmem:[#allocation7 + $0x138] sm:$0xff]
    %v185 = vld [vmem:[#allocation7 + $0x140] sm:$0xff]
    %v186 = vld [vmem:[#allocation7 + $0x148] sm:$0xff]
    %v187 = vld [vmem:[#allocation7 + $0x150] sm:$0xff]
    %v188 = vld [vmem:[#allocation7 + $0x158] sm:$0xff]
    %v189 = vld [vmem:[#allocation7 + $0x160] sm:$0xff]
    %v190 = vld [vmem:[#allocation7 + $0x168] sm:$0xff]
    %v191 = vld [vmem:[#allocation7 + $0x170] sm:$0xff]
    %v192 = vld [vmem:[#allocation7 + $0x178] sm:$0xff]
    %v193 = vld [vmem:[#allocation7 + $0x180] sm:$0xff]
    %v194 = vld [vmem:[#allocation7 + $0x188] sm:$0xff]
    %v195 = vld [vmem:[#allocation7 + $0x190] sm:$0xff]
    %v196 = vld [vmem:[#allocation7 + $0x198] sm:$0xff]
    %v197 = vld [vmem:[#allocation7 + $0x1a0] sm:$0xff]
    %v198 = vld [vmem:[#allocation7 + $0x1a8] sm:$0xff]
    %v199 = vld [vmem:[#allocation7 + $0x1b0] sm:$0xff]
    %v200 = vld [vmem:[#allocation7 + $0x1b8] sm:$0xff]
    %v201 = vld [vmem:[#allocation7 + $0x1c0] sm:$0xff]
    %v202 = vld [vmem:[#allocation7 + $0x1c8] sm:$0xff]
    %v203 = vld [vmem:[#allocation7 + $0x1d0] sm:$0xff]
    %v204 = vld [vmem:[#allocation7 + $0x1d8] sm:$0xff]
    %v205 = vld [vmem:[#allocation7 + $0x1e0] sm:$0xff]
    %v206 = vld [vmem:[#allocation7 + $0x1e8] sm:$0xff]
    %v207 = vld [vmem:[#allocation7 + $0x1f0] sm:$0xff]
    %v208 = vld [vmem:[#allocation7 + $0x1f8] sm:$0xff]
    %v209 = vld [vmem:[#allocation7 + $0x200] sm:$0xff]
    %v210 = vld [vmem:[#allocation7 + $0x208] sm:$0xff]
    %v211 = vld [vmem:[#allocation7 + $0x210] sm:$0xff]
    %v212 = vld [vmem:[#allocation7 + $0x218] sm:$0xff]
    %v213 = vld [vmem:[#allocation7 + $0x220] sm:$0xff]
    %v214 = vld [vmem:[#allocation7 + $0x228] sm:$0xff]
    %v215 = vld [vmem:[#allocation7 + $0x230] sm:$0xff]
    %v216 = vld [vmem:[#allocation7 + $0x238] sm:$0xff]
    %v217 = vld [vmem:[#allocation7 + $0x240] sm:$0xff]
    %v218 = vld [vmem:[#allocation7 + $0x248] sm:$0xff]
    %v219 = vld [vmem:[#allocation7 + $0x250] sm:$0xff]
    %v220 = vld [vmem:[#allocation7 + $0x258] sm:$0xff]
    %v221 = vld [vmem:[#allocation7 + $0x260] sm:$0xff]
    %v222 = vld [vmem:[#allocation7 + $0x268] sm:$0xff]
    %v223 = vld [vmem:[#allocation7 + $0x270] sm:$0xff]
    %v224 = vld [vmem:[#allocation7 + $0x278] sm:$0xff]
    %v225 = vld [vmem:[#allocation7 + $0x280] sm:$0xff]
    %v226 = vld [vmem:[#allocation7 + $0x288] sm:$0xff]
    %v227 = vld [vmem:[#allocation7 + $0x290] sm:$0xff]
    %v228 = vld [vmem:[#allocation7 + $0x298] sm:$0xff]
    %v229 = vld [vmem:[#allocation7 + $0x2a0] sm:$0xff]
    %v230 = vld [vmem:[#allocation7 + $0x2a8] sm:$0xff]
    %v231 = vld [vmem:[#allocation7 + $0x2b0] sm:$0xff]
    %v232 = vld [vmem:[#allocation7 + $0x2b8] sm:$0xff]
    %v233 = vld [vmem:[#allocation7 + $0x2c0] sm:$0xff]
    %v234 = vld [vmem:[#allocation7 + $0x2c8] sm:$0xff]
    %v235 = vld [vmem:[#allocation7 + $0x2d0] sm:$0xff]
    %v236 = vld [vmem:[#allocation7 + $0x2d8] sm:$0xff]
    %v237 = vld [vmem:[#allocation7 + $0x2e0] sm:$0xff]
    %v238 = vld [vmem:[#allocation7 + $0x2e8] sm:$0xff]
    %v239 = vld [vmem:[#allocation7 + $0x2f0] sm:$0xff]
    %v240 = vld [vmem:[#allocation7 + $0x2f8] sm:$0xff]
    %v241 = vld [vmem:[#allocation8] sm:$0xff]
    %v242 = vld [vmem:[#allocation8 + $0x8] sm:$0xff]
    %v243 = vld [vmem:[#allocation8 + $0x10] sm:$0xff]
    %v244 = vld [vmem:[#allocation8 + $0x18] sm:$0xff]
    %v245 = vld [vmem:[#allocation8 + $0x20] sm:$0xff]
    %v246 = vld [vmem:[#allocation8 + $0x28] sm:$0xff]
    %v247 = vld [vmem:[#allocation8 + $0x30] sm:$0xff]
    %v248 = vld [vmem:[#allocation8 + $0x38] sm:$0xff]
    %v249 = vld [vmem:[#allocation8 + $0x40] sm:$0xff]
    %v250 = vld [vmem:[#allocation8 + $0x48] sm:$0xff]
    %v251 = vld [vmem:[#allocation8 + $0x50] sm:$0xff]
    %v252 = vld [vmem:[#allocation8 + $0x58] sm:$0xff]
    %v253 = vld [vmem:[#allocation8 + $0x60] sm:$0xff]
    %v254 = vld [vmem:[#allocation8 + $0x68] sm:$0xff]
    %v255 = vld [vmem:[#allocation8 + $0x70] sm:$0xff]
    %v256 = vld [vmem:[#allocation8 + $0x78] sm:$0xff]
    %v257 = vld [vmem:[#allocation8 + $0x80] sm:$0xff]
    %v258 = vld [vmem:[#allocation8 + $0x88] sm:$0xff]
    %v259 = vld [vmem:[#allocation8 + $0x90] sm:$0xff]
    %v260 = vld [vmem:[#allocation8 + $0x98] sm:$0xff]
    %v261 = vld [vmem:[#allocation8 + $0xa0] sm:$0xff]
    %v262 = vld [vmem:[#allocation8 + $0xa8] sm:$0xff]
    %v263 = vld [vmem:[#allocation8 + $0xb0] sm:$0xff]
    %v264 = vld [vmem:[#allocation8 + $0xb8] sm:$0xff]
    %v265 = vld [vmem:[#allocation8 + $0xc0] sm:$0xff]
    %v266 = vld [vmem:[#allocation8 + $0xc8] sm:$0xff]
    %v267 = vld [vmem:[#allocation8 + $0xd0] sm:$0xff]
    %v268 = vld [vmem:[#allocation8 + $0xd8] sm:$0xff]
    %v269 = vld [vmem:[#allocation8 + $0xe0] sm:$0xff]
    %v270 = vld [vmem:[#allocation8 + $0xe8] sm:$0xff]
    %v271 = vld [vmem:[#allocation8 + $0xf0] sm:$0xff]
    %v272 = vld [vmem:[#allocation8 + $0xf8] sm:$0xff]
    %v273 = vld [vmem:[#allocation8 + $0x100] sm:$0xff]
    %v274 = vld [vmem:[#allocation8 + $0x108] sm:$0xff]
    %v275 = vld [vmem:[#allocation8 + $0x110] sm:$0xff]
    %v276 = vld [vmem:[#allocation8 + $0x118] sm:$0xff]
    %v277 = vld [vmem:[#allocation8 + $0x120] sm:$0xff]
    %v278 = vld [vmem:[#allocation8 + $0x128] sm:$0xff]
    %v279 = vld [vmem:[#allocation8 + $0x130] sm:$0xff]
    %v280 = vld [vmem:[#allocation8 + $0x138] sm:$0xff]
    %v281 = vld [vmem:[#allocation8 + $0x140] sm:$0xff]
    %v282 = vld [vmem:[#allocation8 + $0x148] sm:$0xff]
    %v283 = vld [vmem:[#allocation8 + $0x150] sm:$0xff]
    %v284 = vld [vmem:[#allocation8 + $0x158] sm:$0xff]
    %v285 = vld [vmem:[#allocation8 + $0x160] sm:$0xff]
    %v286 = vld [vmem:[#allocation8 + $0x168] sm:$0xff]
    %v287 = vld [vmem:[#allocation8 + $0x170] sm:$0xff]
    %v288 = vld [vmem:[#allocation8 + $0x178] sm:$0xff]
    %v289 = vld [vmem:[#allocation10] sm:$0xff]
    %v290 = vld [vmem:[#allocation10 + $0x8] sm:$0xff]
    %v291 = vld [vmem:[#allocation10 + $0x10] sm:$0xff]
    %v292 = vld [vmem:[#allocation10 + $0x18] sm:$0xff]
    %v293 = vld [vmem:[#allocation10 + $0x20] sm:$0xff]
    %v294 = vld [vmem:[#allocation10 + $0x28] sm:$0xff]
    %v295 = vld [vmem:[#allocation10 + $0x30] sm:$0xff]
    %v296 = vld [vmem:[#allocation10 + $0x38] sm:$0xff]
    %v297 = vld [vmem:[#allocation10 + $0x40] sm:$0xff]
    %v298 = vld [vmem:[#allocation10 + $0x48] sm:$0xff]
    %v299 = vld [vmem:[#allocation10 + $0x50] sm:$0xff]
    %v300 = vld [vmem:[#allocation10 + $0x58] sm:$0xff]
    %v301 = vld [vmem:[#allocation10 + $0x60] sm:$0xff]
    %v302 = vld [vmem:[#allocation10 + $0x68] sm:$0xff]
    %v303 = vld [vmem:[#allocation10 + $0x70] sm:$0xff]
    %v304 = vld [vmem:[#allocation10 + $0x78] sm:$0xff]
    %v305 = vld [vmem:[#allocation10 + $0x80] sm:$0xff]
    %v306 = vld [vmem:[#allocation10 + $0x88] sm:$0xff]
    %v307 = vld [vmem:[#allocation10 + $0x90] sm:$0xff]
    %v308 = vld [vmem:[#allocation10 + $0x98] sm:$0xff]
    %v309 = vld [vmem:[#allocation10 + $0xa0] sm:$0xff]
    %v310 = vld [vmem:[#allocation10 + $0xa8] sm:$0xff]
    %v311 = vld [vmem:[#allocation10 + $0xb0] sm:$0xff]
    %v312 = vld [vmem:[#allocation10 + $0xb8] sm:$0xff]
    %v313 = vld [vmem:[#allocation10 + $0xc0] sm:$0xff]
    %v314 = vld [vmem:[#allocation10 + $0xc8] sm:$0xff]
    %v315 = vld [vmem:[#allocation10 + $0xd0] sm:$0xff]
    %v316 = vld [vmem:[#allocation10 + $0xd8] sm:$0xff]
    %v317 = vld [vmem:[#allocation10 + $0xe0] sm:$0xff]
    %v318 = vld [vmem:[#allocation10 + $0xe8] sm:$0xff]
    %v319 = vld [vmem:[#allocation10 + $0xf0] sm:$0xff]
    %v320 = vld [vmem:[#allocation10 + $0xf8] sm:$0xff]
    %v321 = vld [vmem:[#allocation10 + $0x100] sm:$0xff]
    %v322 = vld [vmem:[#allocation10 + $0x108] sm:$0xff]
    %v323 = vld [vmem:[#allocation10 + $0x110] sm:$0xff]
    %v324 = vld [vmem:[#allocation10 + $0x118] sm:$0xff]
    %v325 = vld [vmem:[#allocation10 + $0x120] sm:$0xff]
    %v326 = vld [vmem:[#allocation10 + $0x128] sm:$0xff]
    %v327 = vld [vmem:[#allocation10 + $0x130] sm:$0xff]
    %v328 = vld [vmem:[#allocation10 + $0x138] sm:$0xff]
    %v329 = vld [vmem:[#allocation10 + $0x140] sm:$0xff]
    %v330 = vld [vmem:[#allocation10 + $0x148] sm:$0xff]
    %v331 = vld [vmem:[#allocation10 + $0x150] sm:$0xff]
    %v332 = vld [vmem:[#allocation10 + $0x158] sm:$0xff]
    %v333 = vld [vmem:[#allocation10 + $0x160] sm:$0xff]
    %v334 = vld [vmem:[#allocation10 + $0x168] sm:$0xff]
    %v335 = vld [vmem:[#allocation10 + $0x170] sm:$0xff]
    %v336 = vld [vmem:[#allocation10 + $0x178] sm:$0xff]
    %v337 = vld [vmem:[#allocation11] sm:$0x7]
    %v338 = vld [vmem:[%s8] sm:$0x7]
    %v339 = vld [vmem:[#allocation13] sm:$0x7]
    %vm340 = vcmask 64512
    %v342 = vsel %vm340, %v141, 0
    %344 = vmatpush.msra.mxu0 0.0
    %345 = vmatpush.msra.mxu0 0.0
    %346 = vmatpush.msra.mxu0 0.0
    %347 = vmatpush.msra.mxu0 0.0
    %348 = vmatpush.msra.mxu0 0.0
    %349 = vmatpush.msra.mxu0 0.0
    %350 = vmatpush.msra.mxu0 0.0
    %351 = vmatpush.msra.mxu0 0.0
    %352 = vmatpush.msra.mxu0 0.0
    %353 = vmatpush.msra.mxu0 0.0
    %354 = vmatpush.msra.mxu0 0.0
    %355 = vmatpush.msra.mxu0 0.0
    %356 = vmatpush.msra.mxu0 0.0
    %357 = vmatpush.msra.mxu0 0.0
    %358 = vmatpush.msra.mxu0 0.0
    %359 = vmatpush.msra.mxu0 %v144
    %360 = vmatmul.f32.gmra.mxu0 %v342
    %v361 = vpop.f32.mrf.mxu0
    %v362 = vadd.f32 0.0, %v361
    %363 = vdwg.mxu0
    %364 = vmatpush.msra.mxu0 %v235
    %365 = vmatpush.msra.mxu0 %v229
    %366 = vmatpush.msra.mxu0 %v223
    %367 = vmatpush.msra.mxu0 %v217
    %368 = vmatpush.msra.mxu0 %v211
    %369 = vmatpush.msra.mxu0 %v205
    %370 = vmatpush.msra.mxu0 %v199
    %371 = vmatpush.msra.mxu0 %v193
    %372 = vmatpush.msra.mxu0 %v187
    %373 = vmatpush.msra.mxu0 %v181
    %374 = vmatpush.msra.mxu0 %v175
    %375 = vmatpush.msra.mxu0 %v169
    %376 = vmatpush.msra.mxu0 %v163
    %377 = vmatpush.msra.mxu0 %v157
    %378 = vmatpush.msra.mxu0 %v151
    %379 = vmatpush.msra.mxu0 %v145
    %380 = vmatmul.f32.gmra.mxu0 %v144
    %v381 = vpop.f32.mrf.mxu0
    %v382 = vadd.f32 0.0, %v381
    %383 = vdwg.mxu0
    %384 = vmatpush.msra.mxu0 %v236
    %385 = vmatpush.msra.mxu0 %v230
    %386 = vmatpush.msra.mxu0 %v224
    %387 = vmatpush.msra.mxu0 %v218
    %388 = vmatpush.msra.mxu0 %v212
    %389 = vmatpush.msra.mxu0 %v206
    %390 = vmatpush.msra.mxu0 %v200
    %391 = vmatpush.msra.mxu0 %v194
    %392 = vmatpush.msra.mxu0 %v188
    %393 = vmatpush.msra.mxu0 %v182
    %394 = vmatpush.msra.mxu0 %v176
    %395 = vmatpush.msra.mxu0 %v170
    %396 = vmatpush.msra.mxu0 %v164
    %397 = vmatpush.msra.mxu0 %v158
    %398 = vmatpush.msra.mxu0 %v152
    %399 = vmatpush.msra.mxu0 %v146
    %400 = vmatmul.f32.gmra.mxu0 %v144
    %v401 = vpop.f32.mrf.mxu0
    %v402 = vadd.f32 0.0, %v401
    %403 = vdwg.mxu0
    %404 = vmatpush.msra.mxu0 %v237
    %405 = vmatpush.msra.mxu0 %v231
    %406 = vmatpush.msra.mxu0 %v225
    %407 = vmatpush.msra.mxu0 %v219
    %408 = vmatpush.msra.mxu0 %v213
    %409 = vmatpush.msra.mxu0 %v207
    %410 = vmatpush.msra.mxu0 %v201
    %411 = vmatpush.msra.mxu0 %v195
    %412 = vmatpush.msra.mxu0 %v189
    %413 = vmatpush.msra.mxu0 %v183
    %414 = vmatpush.msra.mxu0 %v177
    %415 = vmatpush.msra.mxu0 %v171
    %416 = vmatpush.msra.mxu0 %v165
    %417 = vmatpush.msra.mxu0 %v159
    %418 = vmatpush.msra.mxu0 %v153
    %419 = vmatpush.msra.mxu0 %v147
    %420 = vmatmul.f32.gmra.mxu0 %v144
    %v421 = vpop.f32.mrf.mxu0
    %v422 = vadd.f32 0.0, %v421
    %423 = vdwg.mxu0
    %424 = vmatpush.msra.mxu0 %v238
    %425 = vmatpush.msra.mxu0 %v232
    %426 = vmatpush.msra.mxu0 %v226
    %427 = vmatpush.msra.mxu0 %v220
    %428 = vmatpush.msra.mxu0 %v214
    %429 = vmatpush.msra.mxu0 %v208
    %430 = vmatpush.msra.mxu0 %v202
    %431 = vmatpush.msra.mxu0 %v196
    %432 = vmatpush.msra.mxu0 %v190
    %433 = vmatpush.msra.mxu0 %v184
    %434 = vmatpush.msra.mxu0 %v178
    %435 = vmatpush.msra.mxu0 %v172
    %436 = vmatpush.msra.mxu0 %v166
    %437 = vmatpush.msra.mxu0 %v160
    %438 = vmatpush.msra.mxu0 %v154
    %439 = vmatpush.msra.mxu0 %v148
    %440 = vmatmul.f32.gmra.mxu0 %v144
    %v441 = vpop.f32.mrf.mxu0
    %v442 = vadd.f32 0.0, %v441
    %443 = vdwg.mxu0
    %444 = vmatpush.msra.mxu0 %v239
    %445 = vmatpush.msra.mxu0 %v233
    %446 = vmatpush.msra.mxu0 %v227
    %447 = vmatpush.msra.mxu0 %v221
    %448 = vmatpush.msra.mxu0 %v215
    %449 = vmatpush.msra.mxu0 %v209
    %450 = vmatpush.msra.mxu0 %v203
    %451 = vmatpush.msra.mxu0 %v197
    %452 = vmatpush.msra.mxu0 %v191
    %453 = vmatpush.msra.mxu0 %v185
    %454 = vmatpush.msra.mxu0 %v179
    %455 = vmatpush.msra.mxu0 %v173
    %456 = vmatpush.msra.mxu0 %v167
    %457 = vmatpush.msra.mxu0 %v161
    %458 = vmatpush.msra.mxu0 %v155
    %459 = vmatpush.msra.mxu0 %v149
    %460 = vmatmul.f32.gmra.mxu0 %v144
    %v461 = vpop.f32.mrf.mxu0
    %v462 = vadd.f32 0.0, %v461
    %463 = vdwg.mxu0
    %464 = vmatpush.msra.mxu0 %v240
    %465 = vmatpush.msra.mxu0 %v234
    %466 = vmatpush.msra.mxu0 %v228
    %467 = vmatpush.msra.mxu0 %v222
    %468 = vmatpush.msra.mxu0 %v216
    %469 = vmatpush.msra.mxu0 %v210
    %470 = vmatpush.msra.mxu0 %v204
    %471 = vmatpush.msra.mxu0 %v198
    %472 = vmatpush.msra.mxu0 %v192
    %473 = vmatpush.msra.mxu0 %v186
    %474 = vmatpush.msra.mxu0 %v180
    %475 = vmatpush.msra.mxu0 %v174
    %476 = vmatpush.msra.mxu0 %v168
    %477 = vmatpush.msra.mxu0 %v162
    %478 = vmatpush.msra.mxu0 %v156
    %479 = vmatpush.msra.mxu0 %v150
    %480 = vmatmul.f32.gmra.mxu0 %v144
    %v481 = vpop.f32.mrf.mxu0
    %v482 = vadd.f32 0.0, %v481
    %483 = vdwg.mxu0
    %v485 = vperm.slane %v337, 0
    %v486 = vperm.slane %v337, 1
    %v487 = vperm.slane %v337, 2
    %v491 = vadd.f32 %v382, %v485
    %v492 = vadd.f32 %v402, %v486
    %v493 = vadd.f32 %v422, %v487
    %495 = vset.pattern.permute.xlu0 0
    %496 = vperm.xlu0 %495, %v142
    %v497 = vpop.permute.xlu0 %496
    %v499 = vmul.f32 %v497, %v491
    %v500 = vmul.f32 %v497, %v492
    %v501 = vmul.f32 %v497, %v493
    %502 = vmatpush.msra.mxu0 %v286
    %503 = vmatpush.msra.mxu0 %v283
    %504 = vmatpush.msra.mxu0 %v280
    %505 = vmatpush.msra.mxu0 %v277
    %506 = vmatpush.msra.mxu0 %v274
    %507 = vmatpush.msra.mxu0 %v271
    %508 = vmatpush.msra.mxu0 %v268
    %509 = vmatpush.msra.mxu0 %v265
    %510 = vmatpush.msra.mxu0 %v262
    %511 = vmatpush.msra.mxu0 %v259
    %512 = vmatpush.msra.mxu0 %v256
    %513 = vmatpush.msra.mxu0 %v253
    %514 = vmatpush.msra.mxu0 %v250
    %515 = vmatpush.msra.mxu0 %v247
    %516 = vmatpush.msra.mxu0 %v244
    %517 = vmatpush.msra.mxu0 %v241
    %518 = vmatmul.f32.gmra.mxu0 %v362
    %v519 = vpop.f32.mrf.mxu0
    %v520 = vadd.f32 0.0, %v519
    %521 = vdwg.mxu0
    %522 = vmatpush.msra.mxu0 %v287
    %523 = vmatpush.msra.mxu0 %v284
    %524 = vmatpush.msra.mxu0 %v281
    %525 = vmatpush.msra.mxu0 %v278
    %526 = vmatpush.msra.mxu0 %v275
    %527 = vmatpush.msra.mxu0 %v272
    %528 = vmatpush.msra.mxu0 %v269
    %529 = vmatpush.msra.mxu0 %v266
    %530 = vmatpush.msra.mxu0 %v263
    %531 = vmatpush.msra.mxu0 %v260
    %532 = vmatpush.msra.mxu0 %v257
    %533 = vmatpush.msra.mxu0 %v254
    %534 = vmatpush.msra.mxu0 %v251
    %535 = vmatpush.msra.mxu0 %v248
    %536 = vmatpush.msra.mxu0 %v245
    %537 = vmatpush.msra.mxu0 %v242
    %538 = vmatmul.f32.gmra.mxu0 %v362
    %v539 = vpop.f32.mrf.mxu0
    %v540 = vadd.f32 0.0, %v539
    %541 = vdwg.mxu0
    %542 = vmatpush.msra.mxu0 %v288
    %543 = vmatpush.msra.mxu0 %v285
    %544 = vmatpush.msra.mxu0 %v282
    %545 = vmatpush.msra.mxu0 %v279
    %546 = vmatpush.msra.mxu0 %v276
    %547 = vmatpush.msra.mxu0 %v273
    %548 = vmatpush.msra.mxu0 %v270
    %549 = vmatpush.msra.mxu0 %v267
    %550 = vmatpush.msra.mxu0 %v264
    %551 = vmatpush.msra.mxu0 %v261
    %552 = vmatpush.msra.mxu0 %v258
    %553 = vmatpush.msra.mxu0 %v255
    %554 = vmatpush.msra.mxu0 %v252
    %555 = vmatpush.msra.mxu0 %v249
    %556 = vmatpush.msra.mxu0 %v246
    %557 = vmatpush.msra.mxu0 %v243
    %558 = vmatmul.f32.gmra.mxu0 %v362
    %v559 = vpop.f32.mrf.mxu0
    %v560 = vadd.f32 0.0, %v559
    %561 = vdwg.mxu0
    %v562 = vadd.f32 %v499, %v520
    %v563 = vadd.f32 %v500, %v540
    %v564 = vadd.f32 %v501, %v560
    %565 = vmatpush.msra.mxu0 %v334
    %566 = vmatpush.msra.mxu0 %v331
    %567 = vmatpush.msra.mxu0 %v328
    %568 = vmatpush.msra.mxu0 %v325
    %569 = vmatpush.msra.mxu0 %v322
    %570 = vmatpush.msra.mxu0 %v319
    %571 = vmatpush.msra.mxu0 %v316
    %572 = vmatpush.msra.mxu0 %v313
    %573 = vmatpush.msra.mxu0 %v310
    %574 = vmatpush.msra.mxu0 %v307
    %575 = vmatpush.msra.mxu0 %v304
    %576 = vmatpush.msra.mxu0 %v301
    %577 = vmatpush.msra.mxu0 %v298
    %578 = vmatpush.msra.mxu0 %v295
    %579 = vmatpush.msra.mxu0 %v292
    %580 = vmatpush.msra.mxu0 %v289
    %581 = vmatmul.f32.gmra.mxu0 %v143
    %v582 = vpop.f32.mrf.mxu0
    %v583 = vadd.f32 0.0, %v582
    %584 = vdwg.mxu0
    %585 = vmatpush.msra.mxu0 %v335
    %586 = vmatpush.msra.mxu0 %v332
    %587 = vmatpush.msra.mxu0 %v329
    %588 = vmatpush.msra.mxu0 %v326
    %589 = vmatpush.msra.mxu0 %v323
    %590 = vmatpush.msra.mxu0 %v320
    %591 = vmatpush.msra.mxu0 %v317
    %592 = vmatpush.msra.mxu0 %v314
    %593 = vmatpush.msra.mxu0 %v311
    %594 = vmatpush.msra.mxu0 %v308
    %595 = vmatpush.msra.mxu0 %v305
    %596 = vmatpush.msra.mxu0 %v302
    %597 = vmatpush.msra.mxu0 %v299
    %598 = vmatpush.msra.mxu0 %v296
    %599 = vmatpush.msra.mxu0 %v293
    %600 = vmatpush.msra.mxu0 %v290
    %601 = vmatmul.f32.gmra.mxu0 %v143
    %v602 = vpop.f32.mrf.mxu0
    %v603 = vadd.f32 0.0, %v602
    %604 = vdwg.mxu0
    %605 = vmatpush.msra.mxu0 %v336
    %606 = vmatpush.msra.mxu0 %v333
    %607 = vmatpush.msra.mxu0 %v330
    %608 = vmatpush.msra.mxu0 %v327
    %609 = vmatpush.msra.mxu0 %v324
    %610 = vmatpush.msra.mxu0 %v321
    %611 = vmatpush.msra.mxu0 %v318
    %612 = vmatpush.msra.mxu0 %v315
    %613 = vmatpush.msra.mxu0 %v312
    %614 = vmatpush.msra.mxu0 %v309
    %615 = vmatpush.msra.mxu0 %v306
    %616 = vmatpush.msra.mxu0 %v303
    %617 = vmatpush.msra.mxu0 %v300
    %618 = vmatpush.msra.mxu0 %v297
    %619 = vmatpush.msra.mxu0 %v294
    %620 = vmatpush.msra.mxu0 %v291
    %621 = vmatmul.f32.gmra.mxu0 %v143
    %v622 = vpop.f32.mrf.mxu0
    %v623 = vadd.f32 0.0, %v622
    %624 = vdwg.mxu0
    %v625 = vadd.f32 %v562, %v583
    %v626 = vadd.f32 %v563, %v603
    %v627 = vadd.f32 %v564, %v623
    %v629 = vperm.slane %v338, 0
    %v630 = vperm.slane %v338, 1
    %v631 = vperm.slane %v338, 2
    %v635 = vadd.f32 %v625, %v629
    %v636 = vadd.f32 %v626, %v630
    %v637 = vadd.f32 %v627, %v631
    %v639 = vperm.slane %v339, 0
    %v640 = vperm.slane %v339, 1
    %v641 = vperm.slane %v339, 2
    %v645 = vadd.f32 %v442, %v639
    %v646 = vadd.f32 %v462, %v640
    %v647 = vadd.f32 %v482, %v641
    %v648 = vadd.f32 %v635, %v645
    %v649 = vxor.u32 %v648, 2147483648
    %v650 = vmul.f32 %v649, 1.442695
    %v651 = vpow.pop %v650
    %v652 = vadd.f32 %v651, 1.0
    %v653 = vrcp.pop %v652
    %v654 = vmul.f32 %v652, %v653
    %v655 = vsub.f32 1.0, %v654
    %v656 = vmul.f32 %v653, %v655
    %v657 = vadd.f32 %v653, %v656
    %vm658 = vweird.f32 %v652
    %vm659 = vweird.f32 %v653
    %vm660 = vmor %vm658, %vm659
    %v661 = vsel %vm660, %v653, %v657
    %v662 = vand.u32 2147483647, %v652
    %vm663 = vcmp.eq.f32.partialorder %v662, 8.507059e+37
    %v664 = vand.u32 %v652, 2147483648
    %v665 = vor.u32 1.1754944e-38, %v664
    %v666 = vsel %vm663, %v665, %v661
    %v667 = vmul.f32 1.0, %v666
    %v668 = vadd.f32 %v636, %v646
    %v669 = vxor.u32 %v668, 2147483648
    %v670 = vmul.f32 %v669, 1.442695
    %v671 = vpow.pop %v670
    %v672 = vadd.f32 %v671, 1.0
    %v673 = vrcp.pop %v672
    %v674 = vmul.f32 %v672, %v673
    %v675 = vsub.f32 1.0, %v674
    %v676 = vmul.f32 %v673, %v675
    %v677 = vadd.f32 %v673, %v676
    %vm678 = vweird.f32 %v672
    %vm679 = vweird.f32 %v673
    %vm680 = vmor %vm678, %vm679
    %v681 = vsel %vm680, %v673, %v677
    %v682 = vand.u32 2147483647, %v672
    %vm683 = vcmp.eq.f32.partialorder %v682, 8.507059e+37
    %v684 = vand.u32 %v672, 2147483648
    %v685 = vor.u32 1.1754944e-38, %v684
    %v686 = vsel %vm683, %v685, %v681
    %v687 = vmul.f32 1.0, %v686
    %v688 = vmul.f32 %v667, %v647
    %v689 = vadd.f32 %v637, %v688
    %v690 = vtanh.pop %v689
    %v691 = vsub.f32 1.0, %v687
    %v692 = vmul.f32 %v691, %v690
    %v693 = vmul.f32 %v687, %v144
    %v694 = vadd.f32 %v692, %v693
    %s695 = scalar_lea.vmem [#allocation7], 768
    %v696 = vld [vmem:[%s695] sm:$0xff]
    %v697 = vld [vmem:[%s695 + $0x8] sm:$0xff]
    %v698 = vld [vmem:[%s695 + $0x10] sm:$0xff]
    %v699 = vld [vmem:[%s695 + $0x18] sm:$0xff]
    %v700 = vld [vmem:[%s695 + $0x20] sm:$0xff]
    %v701 = vld [vmem:[%s695 + $0x28] sm:$0xff]
    %v702 = vld [vmem:[%s695 + $0x30] sm:$0xff]
    %v703 = vld [vmem:[%s695 + $0x38] sm:$0xff]
    %v704 = vld [vmem:[%s695 + $0x40] sm:$0xff]
    %v705 = vld [vmem:[%s695 + $0x48] sm:$0xff]
    %v706 = vld [vmem:[%s695 + $0x50] sm:$0xff]
    %v707 = vld [vmem:[%s695 + $0x58] sm:$0xff]
    %v708 = vld [vmem:[%s695 + $0x60] sm:$0xff]
    %v709 = vld [vmem:[%s695 + $0x68] sm:$0xff]
    %v710 = vld [vmem:[%s695 + $0x70] sm:$0xff]
    %v711 = vld [vmem:[%s695 + $0x78] sm:$0xff]
    %v712 = vld [vmem:[%s695 + $0x80] sm:$0xff]
    %v713 = vld [vmem:[%s695 + $0x88] sm:$0xff]
    %v714 = vld [vmem:[%s695 + $0x90] sm:$0xff]
    %v715 = vld [vmem:[%s695 + $0x98] sm:$0xff]
    %v716 = vld [vmem:[%s695 + $0xa0] sm:$0xff]
    %v717 = vld [vmem:[%s695 + $0xa8] sm:$0xff]
    %v718 = vld [vmem:[%s695 + $0xb0] sm:$0xff]
    %v719 = vld [vmem:[%s695 + $0xb8] sm:$0xff]
    %v720 = vld [vmem:[%s695 + $0xc0] sm:$0xff]
    %v721 = vld [vmem:[%s695 + $0xc8] sm:$0xff]
    %v722 = vld [vmem:[%s695 + $0xd0] sm:$0xff]
    %v723 = vld [vmem:[%s695 + $0xd8] sm:$0xff]
    %v724 = vld [vmem:[%s695 + $0xe0] sm:$0xff]
    %v725 = vld [vmem:[%s695 + $0xe8] sm:$0xff]
    %v726 = vld [vmem:[%s695 + $0xf0] sm:$0xff]
    %v727 = vld [vmem:[%s695 + $0xf8] sm:$0xff]
    %v728 = vld [vmem:[%s695 + $0x100] sm:$0xff]
    %v729 = vld [vmem:[%s695 + $0x108] sm:$0xff]
    %v730 = vld [vmem:[%s695 + $0x110] sm:$0xff]
    %v731 = vld [vmem:[%s695 + $0x118] sm:$0xff]
    %v732 = vld [vmem:[%s695 + $0x120] sm:$0xff]
    %v733 = vld [vmem:[%s695 + $0x128] sm:$0xff]
    %v734 = vld [vmem:[%s695 + $0x130] sm:$0xff]
    %v735 = vld [vmem:[%s695 + $0x138] sm:$0xff]
    %v736 = vld [vmem:[%s695 + $0x140] sm:$0xff]
    %v737 = vld [vmem:[%s695 + $0x148] sm:$0xff]
    %v738 = vld [vmem:[%s695 + $0x150] sm:$0xff]
    %v739 = vld [vmem:[%s695 + $0x158] sm:$0xff]
    %v740 = vld [vmem:[%s695 + $0x160] sm:$0xff]
    %v741 = vld [vmem:[%s695 + $0x168] sm:$0xff]
    %v742 = vld [vmem:[%s695 + $0x170] sm:$0xff]
    %v743 = vld [vmem:[%s695 + $0x178] sm:$0xff]
    %v744 = vld [vmem:[%s695 + $0x180] sm:$0xff]
    %v745 = vld [vmem:[%s695 + $0x188] sm:$0xff]
    %v746 = vld [vmem:[%s695 + $0x190] sm:$0xff]
    %v747 = vld [vmem:[%s695 + $0x198] sm:$0xff]
    %v748 = vld [vmem:[%s695 + $0x1a0] sm:$0xff]
    %v749 = vld [vmem:[%s695 + $0x1a8] sm:$0xff]
    %v750 = vld [vmem:[%s695 + $0x1b0] sm:$0xff]
    %v751 = vld [vmem:[%s695 + $0x1b8] sm:$0xff]
    %v752 = vld [vmem:[%s695 + $0x1c0] sm:$0xff]
    %v753 = vld [vmem:[%s695 + $0x1c8] sm:$0xff]
    %v754 = vld [vmem:[%s695 + $0x1d0] sm:$0xff]
    %v755 = vld [vmem:[%s695 + $0x1d8] sm:$0xff]
    %v756 = vld [vmem:[%s695 + $0x1e0] sm:$0xff]
    %v757 = vld [vmem:[%s695 + $0x1e8] sm:$0xff]
    %v758 = vld [vmem:[%s695 + $0x1f0] sm:$0xff]
    %v759 = vld [vmem:[%s695 + $0x1f8] sm:$0xff]
    %v760 = vld [vmem:[%s695 + $0x200] sm:$0xff]
    %v761 = vld [vmem:[%s695 + $0x208] sm:$0xff]
    %v762 = vld [vmem:[%s695 + $0x210] sm:$0xff]
    %v763 = vld [vmem:[%s695 + $0x218] sm:$0xff]
    %v764 = vld [vmem:[%s695 + $0x220] sm:$0xff]
    %v765 = vld [vmem:[%s695 + $0x228] sm:$0xff]
    %v766 = vld [vmem:[%s695 + $0x230] sm:$0xff]
    %v767 = vld [vmem:[%s695 + $0x238] sm:$0xff]
    %v768 = vld [vmem:[%s695 + $0x240] sm:$0xff]
    %v769 = vld [vmem:[%s695 + $0x248] sm:$0xff]
    %v770 = vld [vmem:[%s695 + $0x250] sm:$0xff]
    %v771 = vld [vmem:[%s695 + $0x258] sm:$0xff]
    %v772 = vld [vmem:[%s695 + $0x260] sm:$0xff]
    %v773 = vld [vmem:[%s695 + $0x268] sm:$0xff]
    %v774 = vld [vmem:[%s695 + $0x270] sm:$0xff]
    %v775 = vld [vmem:[%s695 + $0x278] sm:$0xff]
    %v776 = vld [vmem:[%s695 + $0x280] sm:$0xff]
    %v777 = vld [vmem:[%s695 + $0x288] sm:$0xff]
    %v778 = vld [vmem:[%s695 + $0x290] sm:$0xff]
    %v779 = vld [vmem:[%s695 + $0x298] sm:$0xff]
    %v780 = vld [vmem:[%s695 + $0x2a0] sm:$0xff]
    %v781 = vld [vmem:[%s695 + $0x2a8] sm:$0xff]
    %v782 = vld [vmem:[%s695 + $0x2b0] sm:$0xff]
    %v783 = vld [vmem:[%s695 + $0x2b8] sm:$0xff]
    %v784 = vld [vmem:[%s695 + $0x2c0] sm:$0xff]
    %v785 = vld [vmem:[%s695 + $0x2c8] sm:$0xff]
    %v786 = vld [vmem:[%s695 + $0x2d0] sm:$0xff]
    %v787 = vld [vmem:[%s695 + $0x2d8] sm:$0xff]
    %v788 = vld [vmem:[%s695 + $0x2e0] sm:$0xff]
    %v789 = vld [vmem:[%s695 + $0x2e8] sm:$0xff]
    %v790 = vld [vmem:[%s695 + $0x2f0] sm:$0xff]
    %v791 = vld [vmem:[%s695 + $0x2f8] sm:$0xff]
    %s792 = scalar_lea.vmem [#allocation8], 384
    %v793 = vld [vmem:[%s792] sm:$0xff]
    %v794 = vld [vmem:[%s792 + $0x8] sm:$0xff]
    %v795 = vld [vmem:[%s792 + $0x10] sm:$0xff]
    %v796 = vld [vmem:[%s792 + $0x18] sm:$0xff]
    %v797 = vld [vmem:[%s792 + $0x20] sm:$0xff]
    %v798 = vld [vmem:[%s792 + $0x28] sm:$0xff]
    %v799 = vld [vmem:[%s792 + $0x30] sm:$0xff]
    %v800 = vld [vmem:[%s792 + $0x38] sm:$0xff]
    %v801 = vld [vmem:[%s792 + $0x40] sm:$0xff]
    %v802 = vld [vmem:[%s792 + $0x48] sm:$0xff]
    %v803 = vld [vmem:[%s792 + $0x50] sm:$0xff]
    %v804 = vld [vmem:[%s792 + $0x58] sm:$0xff]
    %v805 = vld [vmem:[%s792 + $0x60] sm:$0xff]
    %v806 = vld [vmem:[%s792 + $0x68] sm:$0xff]
    %v807 = vld [vmem:[%s792 + $0x70] sm:$0xff]
    %v808 = vld [vmem:[%s792 + $0x78] sm:$0xff]
    %v809 = vld [vmem:[%s792 + $0x80] sm:$0xff]
    %v810 = vld [vmem:[%s792 + $0x88] sm:$0xff]
    %v811 = vld [vmem:[%s792 + $0x90] sm:$0xff]
    %v812 = vld [vmem:[%s792 + $0x98] sm:$0xff]
    %v813 = vld [vmem:[%s792 + $0xa0] sm:$0xff]
    %v814 = vld [vmem:[%s792 + $0xa8] sm:$0xff]
    %v815 = vld [vmem:[%s792 + $0xb0] sm:$0xff]
    %v816 = vld [vmem:[%s792 + $0xb8] sm:$0xff]
    %v817 = vld [vmem:[%s792 + $0xc0] sm:$0xff]
    %v818 = vld [vmem:[%s792 + $0xc8] sm:$0xff]
    %v819 = vld [vmem:[%s792 + $0xd0] sm:$0xff]
    %v820 = vld [vmem:[%s792 + $0xd8] sm:$0xff]
    %v821 = vld [vmem:[%s792 + $0xe0] sm:$0xff]
    %v822 = vld [vmem:[%s792 + $0xe8] sm:$0xff]
    %v823 = vld [vmem:[%s792 + $0xf0] sm:$0xff]
    %v824 = vld [vmem:[%s792 + $0xf8] sm:$0xff]
    %v825 = vld [vmem:[%s792 + $0x100] sm:$0xff]
    %v826 = vld [vmem:[%s792 + $0x108] sm:$0xff]
    %v827 = vld [vmem:[%s792 + $0x110] sm:$0xff]
    %v828 = vld [vmem:[%s792 + $0x118] sm:$0xff]
    %v829 = vld [vmem:[%s792 + $0x120] sm:$0xff]
    %v830 = vld [vmem:[%s792 + $0x128] sm:$0xff]
    %v831 = vld [vmem:[%s792 + $0x130] sm:$0xff]
    %v832 = vld [vmem:[%s792 + $0x138] sm:$0xff]
    %v833 = vld [vmem:[%s792 + $0x140] sm:$0xff]
    %v834 = vld [vmem:[%s792 + $0x148] sm:$0xff]
    %v835 = vld [vmem:[%s792 + $0x150] sm:$0xff]
    %v836 = vld [vmem:[%s792 + $0x158] sm:$0xff]
    %v837 = vld [vmem:[%s792 + $0x160] sm:$0xff]
    %v838 = vld [vmem:[%s792 + $0x168] sm:$0xff]
    %v839 = vld [vmem:[%s792 + $0x170] sm:$0xff]
    %v840 = vld [vmem:[%s792 + $0x178] sm:$0xff]
    %s841 = scalar_lea.vmem [#allocation10], 384
    %v842 = vld [vmem:[%s841] sm:$0xff]
    %v843 = vld [vmem:[%s841 + $0x8] sm:$0xff]
    %v844 = vld [vmem:[%s841 + $0x10] sm:$0xff]
    %v845 = vld [vmem:[%s841 + $0x18] sm:$0xff]
    %v846 = vld [vmem:[%s841 + $0x20] sm:$0xff]
    %v847 = vld [vmem:[%s841 + $0x28] sm:$0xff]
    %v848 = vld [vmem:[%s841 + $0x30] sm:$0xff]
    %v849 = vld [vmem:[%s841 + $0x38] sm:$0xff]
    %v850 = vld [vmem:[%s841 + $0x40] sm:$0xff]
    %v851 = vld [vmem:[%s841 + $0x48] sm:$0xff]
    %v852 = vld [vmem:[%s841 + $0x50] sm:$0xff]
    %v853 = vld [vmem:[%s841 + $0x58] sm:$0xff]
    %v854 = vld [vmem:[%s841 + $0x60] sm:$0xff]
    %v855 = vld [vmem:[%s841 + $0x68] sm:$0xff]
    %v856 = vld [vmem:[%s841 + $0x70] sm:$0xff]
    %v857 = vld [vmem:[%s841 + $0x78] sm:$0xff]
    %v858 = vld [vmem:[%s841 + $0x80] sm:$0xff]
    %v859 = vld [vmem:[%s841 + $0x88] sm:$0xff]
    %v860 = vld [vmem:[%s841 + $0x90] sm:$0xff]
    %v861 = vld [vmem:[%s841 + $0x98] sm:$0xff]
    %v862 = vld [vmem:[%s841 + $0xa0] sm:$0xff]
    %v863 = vld [vmem:[%s841 + $0xa8] sm:$0xff]
    %v864 = vld [vmem:[%s841 + $0xb0] sm:$0xff]
    %v865 = vld [vmem:[%s841 + $0xb8] sm:$0xff]
    %v866 = vld [vmem:[%s841 + $0xc0] sm:$0xff]
    %v867 = vld [vmem:[%s841 + $0xc8] sm:$0xff]
    %v868 = vld [vmem:[%s841 + $0xd0] sm:$0xff]
    %v869 = vld [vmem:[%s841 + $0xd8] sm:$0xff]
    %v870 = vld [vmem:[%s841 + $0xe0] sm:$0xff]
    %v871 = vld [vmem:[%s841 + $0xe8] sm:$0xff]
    %v872 = vld [vmem:[%s841 + $0xf0] sm:$0xff]
    %v873 = vld [vmem:[%s841 + $0xf8] sm:$0xff]
    %v874 = vld [vmem:[%s841 + $0x100] sm:$0xff]
    %v875 = vld [vmem:[%s841 + $0x108] sm:$0xff]
    %v876 = vld [vmem:[%s841 + $0x110] sm:$0xff]
    %v877 = vld [vmem:[%s841 + $0x118] sm:$0xff]
    %v878 = vld [vmem:[%s841 + $0x120] sm:$0xff]
    %v879 = vld [vmem:[%s841 + $0x128] sm:$0xff]
    %v880 = vld [vmem:[%s841 + $0x130] sm:$0xff]
    %v881 = vld [vmem:[%s841 + $0x138] sm:$0xff]
    %v882 = vld [vmem:[%s841 + $0x140] sm:$0xff]
    %v883 = vld [vmem:[%s841 + $0x148] sm:$0xff]
    %v884 = vld [vmem:[%s841 + $0x150] sm:$0xff]
    %v885 = vld [vmem:[%s841 + $0x158] sm:$0xff]
    %v886 = vld [vmem:[%s841 + $0x160] sm:$0xff]
    %v887 = vld [vmem:[%s841 + $0x168] sm:$0xff]
    %v888 = vld [vmem:[%s841 + $0x170] sm:$0xff]
    %v889 = vld [vmem:[%s841 + $0x178] sm:$0xff]
    %s890 = scalar_lea.vmem [#allocation11], 3
    %v891 = vld [vmem:[%s890] sm:$0x7]
    %s892 = scalar_lea.vmem %s8, 3
    %v893 = vld [vmem:[%s892] sm:$0x7]
    %s894 = scalar_lea.vmem [#allocation13], 3
    %v895 = vld [vmem:[%s894] sm:$0x7]
    %896 = vmatpush.msra.mxu0 0.0
    %897 = vmatpush.msra.mxu0 0.0
    %898 = vmatpush.msra.mxu0 0.0
    %899 = vmatpush.msra.mxu0 0.0
    %900 = vmatpush.msra.mxu0 0.0
    %901 = vmatpush.msra.mxu0 0.0
    %902 = vmatpush.msra.mxu0 0.0
    %903 = vmatpush.msra.mxu0 0.0
    %904 = vmatpush.msra.mxu0 0.0
    %905 = vmatpush.msra.mxu0 0.0
    %906 = vmatpush.msra.mxu0 0.0
    %907 = vmatpush.msra.mxu0 0.0
    %908 = vmatpush.msra.mxu0 0.0
    %909 = vmatpush.msra.mxu0 0.0
    %910 = vmatpush.msra.mxu0 0.0
    %911 = vmatpush.msra.mxu0 %v694
    %912 = vmatmul.f32.gmra.mxu0 %v342
    %v913 = vpop.f32.mrf.mxu0
    %v914 = vadd.f32 0.0, %v913
    %915 = vdwg.mxu0
    %916 = vmatpush.msra.mxu0 %v786
    %917 = vmatpush.msra.mxu0 %v780
    %918 = vmatpush.msra.mxu0 %v774
    %919 = vmatpush.msra.mxu0 %v768
    %920 = vmatpush.msra.mxu0 %v762
    %921 = vmatpush.msra.mxu0 %v756
    %922 = vmatpush.msra.mxu0 %v750
    %923 = vmatpush.msra.mxu0 %v744
    %924 = vmatpush.msra.mxu0 %v738
    %925 = vmatpush.msra.mxu0 %v732
    %926 = vmatpush.msra.mxu0 %v726
    %927 = vmatpush.msra.mxu0 %v720
    %928 = vmatpush.msra.mxu0 %v714
    %929 = vmatpush.msra.mxu0 %v708
    %930 = vmatpush.msra.mxu0 %v702
    %931 = vmatpush.msra.mxu0 %v696
    %932 = vmatmul.f32.gmra.mxu0 %v694
    %v933 = vpop.f32.mrf.mxu0
    %v934 = vadd.f32 0.0, %v933
    %935 = vdwg.mxu0
    %936 = vmatpush.msra.mxu0 %v787
    %937 = vmatpush.msra.mxu0 %v781
    %938 = vmatpush.msra.mxu0 %v775
    %939 = vmatpush.msra.mxu0 %v769
    %940 = vmatpush.msra.mxu0 %v763
    %941 = vmatpush.msra.mxu0 %v757
    %942 = vmatpush.msra.mxu0 %v751
    %943 = vmatpush.msra.mxu0 %v745
    %944 = vmatpush.msra.mxu0 %v739
    %945 = vmatpush.msra.mxu0 %v733
    %946 = vmatpush.msra.mxu0 %v727
    %947 = vmatpush.msra.mxu0 %v721
    %948 = vmatpush.msra.mxu0 %v715
    %949 = vmatpush.msra.mxu0 %v709
    %950 = vmatpush.msra.mxu0 %v703
    %951 = vmatpush.msra.mxu0 %v697
    %952 = vmatmul.f32.gmra.mxu0 %v694
    %v953 = vpop.f32.mrf.mxu0
    %v954 = vadd.f32 0.0, %v953
    %955 = vdwg.mxu0
    %956 = vmatpush.msra.mxu0 %v788
    %957 = vmatpush.msra.mxu0 %v782
    %958 = vmatpush.msra.mxu0 %v776
    %959 = vmatpush.msra.mxu0 %v770
    %960 = vmatpush.msra.mxu0 %v764
    %961 = vmatpush.msra.mxu0 %v758
    %962 = vmatpush.msra.mxu0 %v752
    %963 = vmatpush.msra.mxu0 %v746
    %964 = vmatpush.msra.mxu0 %v740
    %965 = vmatpush.msra.mxu0 %v734
    %966 = vmatpush.msra.mxu0 %v728
    %967 = vmatpush.msra.mxu0 %v722
    %968 = vmatpush.msra.mxu0 %v716
    %969 = vmatpush.msra.mxu0 %v710
    %970 = vmatpush.msra.mxu0 %v704
    %971 = vmatpush.msra.mxu0 %v698
    %972 = vmatmul.f32.gmra.mxu0 %v694
    %v973 = vpop.f32.mrf.mxu0
    %v974 = vadd.f32 0.0, %v973
    %975 = vdwg.mxu0
    %976 = vmatpush.msra.mxu0 %v789
    %977 = vmatpush.msra.mxu0 %v783
    %978 = vmatpush.msra.mxu0 %v777
    %979 = vmatpush.msra.mxu0 %v771
    %980 = vmatpush.msra.mxu0 %v765
    %981 = vmatpush.msra.mxu0 %v759
    %982 = vmatpush.msra.mxu0 %v753
    %983 = vmatpush.msra.mxu0 %v747
    %984 = vmatpush.msra.mxu0 %v741
    %985 = vmatpush.msra.mxu0 %v735
    %986 = vmatpush.msra.mxu0 %v729
    %987 = vmatpush.msra.mxu0 %v723
    %988 = vmatpush.msra.mxu0 %v717
    %989 = vmatpush.msra.mxu0 %v711
    %990 = vmatpush.msra.mxu0 %v705
    %991 = vmatpush.msra.mxu0 %v699
    %992 = vmatmul.f32.gmra.mxu0 %v694
    %v993 = vpop.f32.mrf.mxu0
    %v994 = vadd.f32 0.0, %v993
    %995 = vdwg.mxu0
    %996 = vmatpush.msra.mxu0 %v790
    %997 = vmatpush.msra.mxu0 %v784
    %998 = vmatpush.msra.mxu0 %v778
    %999 = vmatpush.msra.mxu0 %v772
    %1000 = vmatpush.msra.mxu0 %v766
    %1001 = vmatpush.msra.mxu0 %v760
    %1002 = vmatpush.msra.mxu0 %v754
    %1003 = vmatpush.msra.mxu0 %v748
    %1004 = vmatpush.msra.mxu0 %v742
    %1005 = vmatpush.msra.mxu0 %v736
    %1006 = vmatpush.msra.mxu0 %v730
    %1007 = vmatpush.msra.mxu0 %v724
    %1008 = vmatpush.msra.mxu0 %v718
    %1009 = vmatpush.msra.mxu0 %v712
    %1010 = vmatpush.msra.mxu0 %v706
    %1011 = vmatpush.msra.mxu0 %v700
    %1012 = vmatmul.f32.gmra.mxu0 %v694
    %v1013 = vpop.f32.mrf.mxu0
    %v1014 = vadd.f32 0.0, %v1013
    %1015 = vdwg.mxu0
    %1016 = vmatpush.msra.mxu0 %v791
    %1017 = vmatpush.msra.mxu0 %v785
    %1018 = vmatpush.msra.mxu0 %v779
    %1019 = vmatpush.msra.mxu0 %v773
    %1020 = vmatpush.msra.mxu0 %v767
    %1021 = vmatpush.msra.mxu0 %v761
    %1022 = vmatpush.msra.mxu0 %v755
    %1023 = vmatpush.msra.mxu0 %v749
    %1024 = vmatpush.msra.mxu0 %v743
    %1025 = vmatpush.msra.mxu0 %v737
    %1026 = vmatpush.msra.mxu0 %v731
    %1027 = vmatpush.msra.mxu0 %v725
    %1028 = vmatpush.msra.mxu0 %v719
    %1029 = vmatpush.msra.mxu0 %v713
    %1030 = vmatpush.msra.mxu0 %v707
    %1031 = vmatpush.msra.mxu0 %v701
    %1032 = vmatmul.f32.gmra.mxu0 %v694
    %v1033 = vpop.f32.mrf.mxu0
    %v1034 = vadd.f32 0.0, %v1033
    %1035 = vdwg.mxu0
    %v1037 = vperm.slane %v891, 0
    %v1038 = vperm.slane %v891, 1
    %v1039 = vperm.slane %v891, 2
    %v1043 = vadd.f32 %v934, %v1037
    %v1044 = vadd.f32 %v954, %v1038
    %v1045 = vadd.f32 %v974, %v1039
    %v1046 = vmul.f32 %v497, %v1043
    %v1047 = vmul.f32 %v497, %v1044
    %v1048 = vmul.f32 %v497, %v1045
    %1049 = vmatpush.msra.mxu0 %v838
    %1050 = vmatpush.msra.mxu0 %v835
    %1051 = vmatpush.msra.mxu0 %v832
    %1052 = vmatpush.msra.mxu0 %v829
    %1053 = vmatpush.msra.mxu0 %v826
    %1054 = vmatpush.msra.mxu0 %v823
    %1055 = vmatpush.msra.mxu0 %v820
    %1056 = vmatpush.msra.mxu0 %v817
    %1057 = vmatpush.msra.mxu0 %v814
    %1058 = vmatpush.msra.mxu0 %v811
    %1059 = vmatpush.msra.mxu0 %v808
    %1060 = vmatpush.msra.mxu0 %v805
    %1061 = vmatpush.msra.mxu0 %v802
    %1062 = vmatpush.msra.mxu0 %v799
    %1063 = vmatpush.msra.mxu0 %v796
    %1064 = vmatpush.msra.mxu0 %v793
    %1065 = vmatmul.f32.gmra.mxu0 %v914
    %v1066 = vpop.f32.mrf.mxu0
    %v1067 = vadd.f32 0.0, %v1066
    %1068 = vdwg.mxu0
    %1069 = vmatpush.msra.mxu0 %v839
    %1070 = vmatpush.msra.mxu0 %v836
    %1071 = vmatpush.msra.mxu0 %v833
    %1072 = vmatpush.msra.mxu0 %v830
    %1073 = vmatpush.msra.mxu0 %v827
    %1074 = vmatpush.msra.mxu0 %v824
    %1075 = vmatpush.msra.mxu0 %v821
    %1076 = vmatpush.msra.mxu0 %v818
    %1077 = vmatpush.msra.mxu0 %v815
    %1078 = vmatpush.msra.mxu0 %v812
    %1079 = vmatpush.msra.mxu0 %v809
    %1080 = vmatpush.msra.mxu0 %v806
    %1081 = vmatpush.msra.mxu0 %v803
    %1082 = vmatpush.msra.mxu0 %v800
    %1083 = vmatpush.msra.mxu0 %v797
    %1084 = vmatpush.msra.mxu0 %v794
    %1085 = vmatmul.f32.gmra.mxu0 %v914
    %v1086 = vpop.f32.mrf.mxu0
    %v1087 = vadd.f32 0.0, %v1086
    %1088 = vdwg.mxu0
    %1089 = vmatpush.msra.mxu0 %v840
    %1090 = vmatpush.msra.mxu0 %v837
    %1091 = vmatpush.msra.mxu0 %v834
    %1092 = vmatpush.msra.mxu0 %v831
    %1093 = vmatpush.msra.mxu0 %v828
    %1094 = vmatpush.msra.mxu0 %v825
    %1095 = vmatpush.msra.mxu0 %v822
    %1096 = vmatpush.msra.mxu0 %v819
    %1097 = vmatpush.msra.mxu0 %v816
    %1098 = vmatpush.msra.mxu0 %v813
    %1099 = vmatpush.msra.mxu0 %v810
    %1100 = vmatpush.msra.mxu0 %v807
    %1101 = vmatpush.msra.mxu0 %v804
    %1102 = vmatpush.msra.mxu0 %v801
    %1103 = vmatpush.msra.mxu0 %v798
    %1104 = vmatpush.msra.mxu0 %v795
    %1105 = vmatmul.f32.gmra.mxu0 %v914
    %v1106 = vpop.f32.mrf.mxu0
    %v1107 = vadd.f32 0.0, %v1106
    %1108 = vdwg.mxu0
    %v1109 = vadd.f32 %v1046, %v1067
    %v1110 = vadd.f32 %v1047, %v1087
    %v1111 = vadd.f32 %v1048, %v1107
    %1112 = vmatpush.msra.mxu0 %v887
    %1113 = vmatpush.msra.mxu0 %v884
    %1114 = vmatpush.msra.mxu0 %v881
    %1115 = vmatpush.msra.mxu0 %v878
    %1116 = vmatpush.msra.mxu0 %v875
    %1117 = vmatpush.msra.mxu0 %v872
    %1118 = vmatpush.msra.mxu0 %v869
    %1119 = vmatpush.msra.mxu0 %v866
    %1120 = vmatpush.msra.mxu0 %v863
    %1121 = vmatpush.msra.mxu0 %v860
    %1122 = vmatpush.msra.mxu0 %v857
    %1123 = vmatpush.msra.mxu0 %v854
    %1124 = vmatpush.msra.mxu0 %v851
    %1125 = vmatpush.msra.mxu0 %v848
    %1126 = vmatpush.msra.mxu0 %v845
    %1127 = vmatpush.msra.mxu0 %v842
    %1128 = vmatmul.f32.gmra.mxu0 %v143
    %v1129 = vpop.f32.mrf.mxu0
    %v1130 = vadd.f32 0.0, %v1129
    %1131 = vdwg.mxu0
    %1132 = vmatpush.msra.mxu0 %v888
    %1133 = vmatpush.msra.mxu0 %v885
    %1134 = vmatpush.msra.mxu0 %v882
    %1135 = vmatpush.msra.mxu0 %v879
    %1136 = vmatpush.msra.mxu0 %v876
    %1137 = vmatpush.msra.mxu0 %v873
    %1138 = vmatpush.msra.mxu0 %v870
    %1139 = vmatpush.msra.mxu0 %v867
    %1140 = vmatpush.msra.mxu0 %v864
    %1141 = vmatpush.msra.mxu0 %v861
    %1142 = vmatpush.msra.mxu0 %v858
    %1143 = vmatpush.msra.mxu0 %v855
    %1144 = vmatpush.msra.mxu0 %v852
    %1145 = vmatpush.msra.mxu0 %v849
    %1146 = vmatpush.msra.mxu0 %v846
    %1147 = vmatpush.msra.mxu0 %v843
    %1148 = vmatmul.f32.gmra.mxu0 %v143
    %v1149 = vpop.f32.mrf.mxu0
    %v1150 = vadd.f32 0.0, %v1149
    %1151 = vdwg.mxu0
    %1152 = vmatpush.msra.mxu0 %v889
    %1153 = vmatpush.msra.mxu0 %v886
    %1154 = vmatpush.msra.mxu0 %v883
    %1155 = vmatpush.msra.mxu0 %v880
    %1156 = vmatpush.msra.mxu0 %v877
    %1157 = vmatpush.msra.mxu0 %v874
    %1158 = vmatpush.msra.mxu0 %v871
    %1159 = vmatpush.msra.mxu0 %v868
    %1160 = vmatpush.msra.mxu0 %v865
    %1161 = vmatpush.msra.mxu0 %v862
    %1162 = vmatpush.msra.mxu0 %v859
    %1163 = vmatpush.msra.mxu0 %v856
    %1164 = vmatpush.msra.mxu0 %v853
    %1165 = vmatpush.msra.mxu0 %v850
    %1166 = vmatpush.msra.mxu0 %v847
    %1167 = vmatpush.msra.mxu0 %v844
    %1168 = vmatmul.f32.gmra.mxu0 %v143
    %v1169 = vpop.f32.mrf.mxu0
    %v1170 = vadd.f32 0.0, %v1169
    %1171 = vdwg.mxu0
    %v1172 = vadd.f32 %v1109, %v1130
    %v1173 = vadd.f32 %v1110, %v1150
    %v1174 = vadd.f32 %v1111, %v1170
    %v1176 = vperm.slane %v893, 0
    %v1177 = vperm.slane %v893, 1
    %v1178 = vperm.slane %v893, 2
    %v1182 = vadd.f32 %v1172, %v1176
    %v1183 = vadd.f32 %v1173, %v1177
    %v1184 = vadd.f32 %v1174, %v1178
    %v1186 = vperm.slane %v895, 0
    %v1187 = vperm.slane %v895, 1
    %v1188 = vperm.slane %v895, 2
    %v1192 = vadd.f32 %v994, %v1186
    %v1193 = vadd.f32 %v1014, %v1187
    %v1194 = vadd.f32 %v1034, %v1188
    %v1195 = vadd.f32 %v1182, %v1192
    %v1196 = vxor.u32 %v1195, 2147483648
    %v1197 = vmul.f32 %v1196, 1.442695
    %v1198 = vpow.pop %v1197
    %v1199 = vadd.f32 %v1198, 1.0
    %v1200 = vrcp.pop %v1199
    %v1201 = vmul.f32 %v1199, %v1200
    %v1202 = vsub.f32 1.0, %v1201
    %v1203 = vmul.f32 %v1200, %v1202
    %v1204 = vadd.f32 %v1200, %v1203
    %vm1205 = vweird.f32 %v1199
    %vm1206 = vweird.f32 %v1200
    %vm1207 = vmor %vm1205, %vm1206
    %v1208 = vsel %vm1207, %v1200, %v1204
    %v1209 = vand.u32 2147483647, %v1199
    %vm1210 = vcmp.eq.f32.partialorder %v1209, 8.507059e+37
    %v1211 = vand.u32 %v1199, 2147483648
    %v1212 = vor.u32 1.1754944e-38, %v1211
    %v1213 = vsel %vm1210, %v1212, %v1208
    %v1214 = vmul.f32 1.0, %v1213
    %v1215 = vadd.f32 %v1183, %v1193
    %v1216 = vxor.u32 %v1215, 2147483648
    %v1217 = vmul.f32 %v1216, 1.442695
    %v1218 = vpow.pop %v1217
    %v1219 = vadd.f32 %v1218, 1.0
    %v1220 = vrcp.pop %v1219
    %v1221 = vmul.f32 %v1219, %v1220
    %v1222 = vsub.f32 1.0, %v1221
    %v1223 = vmul.f32 %v1220, %v1222
    %v1224 = vadd.f32 %v1220, %v1223
    %vm1225 = vweird.f32 %v1219
    %vm1226 = vweird.f32 %v1220
    %vm1227 = vmor %vm1225, %vm1226
    %v1228 = vsel %vm1227, %v1220, %v1224
    %v1229 = vand.u32 2147483647, %v1219
    %vm1230 = vcmp.eq.f32.partialorder %v1229, 8.507059e+37
    %v1231 = vand.u32 %v1219, 2147483648
    %v1232 = vor.u32 1.1754944e-38, %v1231
    %v1233 = vsel %vm1230, %v1232, %v1228
    %v1234 = vmul.f32 1.0, %v1233
    %v1235 = vmul.f32 %v1214, %v1194
    %v1236 = vadd.f32 %v1184, %v1235
    %v1237 = vtanh.pop %v1236
    %v1238 = vsub.f32 1.0, %v1234
    %v1239 = vmul.f32 %v1238, %v1237
    %v1240 = vmul.f32 %v1234, %v694
    %v1241 = vadd.f32 %v1239, %v1240
    %1242 = vst [vmem:[#allocation14] sm:$0xff] %v1241
    // Predicated region
    $region70: #{tpu_custom_call.1} parent=1 // pred_check
      _
    $region71: #{tpu_custom_call.1} parent=1 // pred_check_branch
      %1244 = sbr.rel (0) target = $region73
    $region72: #{tpu_custom_call.1} parent=1 // pred_region
      %1246 = vsyncadd [#allocation4], 0
      %s1248 = sshll.u32 [#allocation14], 4
      %s1249 = int_to_ptr.vmem [resolvable:$true] %s1248
      %s1250 = sshll.u32 %s10, 4
      %s1251 = int_to_ptr.hbm [resolvable:$true] %s1250
      %1253 = dma.vmem_to_hbm [thread:$0]  %s1249, 128, %s1251, [#allocation4]
    $region73: #{tpu_custom_call.1} parent=1 // pred_fallthru
      _
    // Predicated region
    $region74: #{tpu_custom_call.1} parent=1 // pred_check
      _
    $region75: #{tpu_custom_call.1} parent=1 // pred_check_branch
      %1255 = sbr.rel (0) target = $region77
    $region76: #{tpu_custom_call.1} parent=1 // pred_region
      %1257 = dma.done [#allocation4], 128
    $region77: #{tpu_custom_call.1} parent=1 // pred_fallthru
      _
    %1258 = vsyncpa [#allocation3], 1
    %1259 = vsyncpa [#allocation6], 1
    %1260 = vsyncpa [#allocation9], 1
    %1261 = vsyncpa [#allocation12], 1
    %1262 = vsyncpa [#allocation4], 1

</llo_original>
